<compile_context>
chip_gen: v6e
topology: v6e:2x2x1
jax: 0.10.0
libtpu: 0.0.40
codegen_flags: <defaults>
</compile_context>

<pallas_src>
import math
import numpy as np
import jax
import jax.numpy as jnp
from jax.experimental import pallas as pl
from jax.experimental.pallas import tpu as pltpu

OBS_SHAPE = 9
ACTIONS_SHAPE = 1
HIDDEN = [256, 128, 64]
INITIAL_STD = 0.8

SELU_ALPHA = 1.6732632423543772
SELU_SCALE = 1.0507009873554805
HALF_LOG_2PI = 0.5 * math.log(2.0 * math.pi)

MAX_BATCH_TILE = 1024          # sized for v7x's 64 MiB VMEM; fine on v5e/v6e
WEIGHT_DTYPE = jnp.bfloat16    # MXU-native; halves resident weight VMEM + HBM traffic
OUT_WIDTH = 2 * ACTIONS_SHAPE + 2   # [actions_mean | value | action | log_prob]


def _selu(x):
    # nn.SELU semantics: scale * (x if x > 0 else alpha * (exp(x) - 1)); exp -> EUP slot.
    return SELU_SCALE * jnp.where(x > 0, x, SELU_ALPHA * (jnp.exp(x) - 1.0))


def actor_critic_act_kernel(obs_ref, eps_ref, sig_ref,
                            w0_ref, b0_ref, w1_ref, b1_ref,
                            w2_ref, b2_ref, w3_ref, b3_ref,
                            out_ref):
    """Fused actor+critic MLP + Gaussian sampling on one (BT, OBS_SHAPE) tile."""
    x = obs_ref[...].astype(WEIGHT_DTYPE)
    h = _selu(jnp.dot(x, w0_ref[...],
                      preferred_element_type=jnp.float32) + b0_ref[...])
    h = _selu(jnp.dot(h.astype(WEIGHT_DTYPE), w1_ref[...],
                      preferred_element_type=jnp.float32) + b1_ref[...])
    h = _selu(jnp.dot(h.astype(WEIGHT_DTYPE), w2_ref[...],
                      preferred_element_type=jnp.float32) + b2_ref[...])
    y = jnp.dot(h.astype(WEIGHT_DTYPE), w3_ref[...],
                preferred_element_type=jnp.float32) + b3_ref[...]
    # y: (BT, K+1) = [actions_mean | value]
    k = ACTIONS_SHAPE
    mean = y[:, :k]
    sig = sig_ref[...]                 # (1, K) effective per-dim scale = exp(log_std)^2
    eps = eps_ref[...]                 # (BT, K) standard-normal noise
    action = mean + sig * eps
    # log_prob of the sampled action: z = (action - mean) / sig == eps exactly.
    log_prob = (-0.5 * jnp.sum(eps * eps, axis=-1, keepdims=True)
                - jnp.sum(jnp.log(sig), axis=-1, keepdims=True)
                - k * HALF_LOG_2PI)
    # Single lane-merged output slab: [mean | value | action | log_prob].
    out_ref[:, :k + 1] = y.astype(out_ref.dtype)
    out_ref[:, k + 1:2 * k + 1] = action.astype(out_ref.dtype)
    out_ref[:, 2 * k + 1:] = log_prob.astype(out_ref.dtype)


def fuse_actor_critic_params(actor_params, critic_params):
    """Block-diagonal fused weights/biases from per-network params.

    actor_params / critic_params: list of (W (in,out) f32, b (1,out) f32), 4 each.
    Returns list of (W_fused bf16, b_fused f32).
    """
    fused = []
    for layer, ((aw, ab), (cw, cb)) in enumerate(zip(actor_params, critic_params)):
        in_a, out_a = aw.shape
        in_c, out_c = cw.shape
        if layer == 0:
            w = jnp.concatenate([aw, cw], axis=1)       # shared input: stack columns
        else:
            w = jnp.zeros((in_a + in_c, out_a + out_c), jnp.float32)
            w = w.at[:in_a, :out_a].set(aw)
            w = w.at[in_a:, out_a:].set(cw)
        b = jnp.concatenate([ab, cb], axis=1)
        fused.append((w.astype(WEIGHT_DTYPE), b.astype(jnp.float32)))
    return fused


def actor_critic_act(obs, eps, log_std, fused_params):
    """One-kernel act(): returns (actions_mean, value, actions, actions_log_prob)."""
    B = obs.shape[0]
    k = ACTIONS_SHAPE
    # Effective per-dim scale of the module's MVN(scale_tril=diag(std*std)).
    sigma_eff = (jnp.exp(log_std) ** 2).reshape(1, k).astype(jnp.float32)

    bt = B if B <= MAX_BATCH_TILE else MAX_BATCH_TILE
    grid = (pl.cdiv(B, bt),)

    obs_spec = pl.BlockSpec((bt, OBS_SHAPE), lambda i: (i, 0))
    eps_spec = pl.BlockSpec((bt, k), lambda i: (i, 0))
    sig_spec = pl.BlockSpec((1, k), lambda i: (0, 0))
    out_spec = pl.BlockSpec((bt, OUT_WIDTH), lambda i: (i, 0))

    flat_inputs = [obs, eps, sigma_eff]
    in_specs = [obs_spec, eps_spec, sig_spec]
    for w, b in fused_params:
        flat_inputs += [w, b]
        # Constant index_map -> weights/biases stay VMEM-resident across grid steps.
        in_specs += [pl.BlockSpec(w.shape, lambda i: (0, 0)),
                     pl.BlockSpec(b.shape, lambda i: (0, 0))]

    out = pl.pallas_call(
        actor_critic_act_kernel,
        out_shape=jax.ShapeDtypeStruct((B, OUT_WIDTH), jnp.float32),
        grid_spec=pltpu.PrefetchScalarGridSpec(
            num_scalar_prefetch=0,
            grid=grid,
            in_specs=in_specs,
            out_specs=out_spec,
        ),
        compiler_params=pltpu.CompilerParams(
            dimension_semantics=("parallel",),      # shard batch across TCs (v7x)
            vmem_limit_bytes=48 * 1024 * 1024,      # headroom, < v7x 64 MiB
        ),
    )(*flat_inputs)

    actions_mean = out[:, :k]
    value = out[:, k:k + 1]
    actions = out[:, k + 1:2 * k + 1]
    actions_log_prob = out[:, 2 * k + 1]
    return actions_mean, value, actions, actions_log_prob


# ------------------------- deterministic parameter init -------------------------

def _orthogonal(key, out_dim, in_dim, gain):
    """torch.nn.init.orthogonal_ analogue; returned transposed to (in, out)."""
    n = max(out_dim, in_dim)
    a = jax.random.normal(key, (n, n), dtype=jnp.float32)
    q, r = jnp.linalg.qr(a)
    q = q * jnp.sign(jnp.diag(r))
    w = gain * q[:out_dim, :in_dim]              # torch layout (out, in)
    return jnp.asarray(w.T, dtype=jnp.float32)   # kernel layout (in, out)


def _bias(key, in_dim, out_dim):
    bound = 1.0 / np.sqrt(in_dim)
    return jax.random.uniform(key, (1, out_dim), minval=-bound, maxval=bound,
                              dtype=jnp.float32)


def make_mlp_params(key, dims, gains):
    params = []
    keys = jax.random.split(key, 2 * (len(dims) - 1))
    for i in range(len(dims) - 1):
        in_d, out_d = dims[i], dims[i + 1]
        w = _orthogonal(keys[2 * i], out_d, in_d, gains[i])
        b = _bias(keys[2 * i + 1], in_d, out_d)
        params.append((w, b))
    return params


# ------------------------- distribution glue (tiny, plain JAX; for evaluate()) ---

def _mvn_stats(actions_mean, actions, log_std):
    """Matches MultivariateNormal(mean, scale_tril=diag(std*std)) from the module."""
    sigma_eff = jnp.exp(log_std) ** 2
    k = actions_mean.shape[-1]
    log_2pi = jnp.log(2.0 * jnp.pi)
    z = (actions - actions_mean) / sigma_eff
    log_prob = (-0.5 * jnp.sum(z * z, axis=-1)
                - jnp.sum(jnp.log(sigma_eff))
                - 0.5 * k * log_2pi)
    entropy = 0.5 * k * (1.0 + log_2pi) + jnp.sum(jnp.log(sigma_eff))
    entropy = jnp.broadcast_to(entropy, log_prob.shape)
    return log_prob, entropy, sigma_eff


# ------------------------- pure-JAX reference (same bf16 casting) -----------------

def _reference_mlp(obs, params):
    h = obs
    for i, (w, b) in enumerate(params):
        pre = jnp.dot(h.astype(WEIGHT_DTYPE), w.astype(WEIGHT_DTYPE),
                      preferred_element_type=jnp.float32) + b
        h = _selu(pre) if i < len(params) - 1 else pre
    return h


if __name__ == "__main__":
    key = jax.random.PRNGKey(0)
    k_obs, k_actor, k_critic, k_sample = jax.random.split(key, 4)

    B = 32  # small demo batch; kernel tiles up to 1024 rows per grid step
    observations = jax.random.normal(k_obs, (B, OBS_SHAPE), dtype=jnp.float32)
    eps = jax.random.normal(k_sample, (B, ACTIONS_SHAPE), dtype=jnp.float32)

    actor_dims = [OBS_SHAPE] + HIDDEN + [ACTIONS_SHAPE]
    critic_dims = [OBS_SHAPE] + HIDDEN + [1]
    actor_params = make_mlp_params(
        k_actor, actor_dims, [np.sqrt(2), np.sqrt(2), np.sqrt(2), 0.01])
    critic_params = make_mlp_params(
        k_critic, critic_dims, [np.sqrt(2), np.sqrt(2), np.sqrt(2), 1.0])
    fused_params = fuse_actor_critic_params(actor_params, critic_params)
    log_std = jnp.full((ACTIONS_SHAPE,), np.log(INITIAL_STD), dtype=jnp.float32)

    # Hot path: one fused Pallas kernel = actor MLP + critic MLP + sample + log_prob.
    actions_mean, value, actions, actions_log_prob = actor_critic_act(
        observations, eps, log_std, fused_params)

    # entropy is batch-constant; evaluate()-style stats stay in plain-JAX glue.
    _, entropy, sigma_eff = _mvn_stats(actions_mean, actions, log_std)

    # Pure-JAX reference (same bf16 weight/activation casting) for correctness.
    ref_mean = _reference_mlp(observations, actor_params)
    ref_value = _reference_mlp(observations, critic_params)
    ref_actions = ref_mean + sigma_eff * eps
    ref_logp, _, _ = _mvn_stats(ref_mean, ref_actions, log_std)

    jax.block_until_ready((actions_mean, value, actions, actions_log_prob, entropy))

    assert actions_mean.shape == (B, ACTIONS_SHAPE)
    assert value.shape == (B, 1)
    assert actions.shape == (B, ACTIONS_SHAPE)
    assert actions_log_prob.shape == (B,)
    assert entropy.shape == (B,)
    assert bool(jnp.all(jnp.isfinite(actions_mean)))
    assert bool(jnp.all(jnp.isfinite(value)))
    assert bool(jnp.all(jnp.isfinite(actions)))
    assert bool(jnp.all(jnp.isfinite(actions_log_prob)))
    assert bool(jnp.allclose(actions_mean, ref_mean, atol=2e-2, rtol=2e-2))
    assert bool(jnp.allclose(value, ref_value, atol=2e-2, rtol=2e-2))
    assert bool(jnp.allclose(actions, ref_actions, atol=2e-2, rtol=2e-2))
    assert bool(jnp.allclose(actions_log_prob, ref_logp, atol=2e-2, rtol=2e-2))

    print("KERNEL_OK")
</pallas_src>

<mosaic_0001>
module attributes {stable_mosaic.version = 11 : i64} {
  func.func @actor_critic_act_kernel(%arg0: i32, %arg1: memref<32x9xf32, #tpu.memory_space<vmem>>, %arg2: memref<32x1xf32, #tpu.memory_space<vmem>>, %arg3: memref<1x1xf32, #tpu.memory_space<vmem>>, %arg4: memref<9x512xbf16, #tpu.memory_space<vmem>>, %arg5: memref<1x512xf32, #tpu.memory_space<vmem>>, %arg6: memref<512x256xbf16, #tpu.memory_space<vmem>>, %arg7: memref<1x256xf32, #tpu.memory_space<vmem>>, %arg8: memref<256x128xbf16, #tpu.memory_space<vmem>>, %arg9: memref<1x128xf32, #tpu.memory_space<vmem>>, %arg10: memref<128x2xbf16, #tpu.memory_space<vmem>>, %arg11: memref<1x2xf32, #tpu.memory_space<vmem>>, %arg12: memref<32x4xf32, #tpu.memory_space<vmem>>) attributes {dimension_semantics = [#tpu.dimension_semantics<parallel>], iteration_bounds = array<i64: 1>, scalar_prefetch = 0 : i64, scratch_operands = 0 : i64, tpu.core_type = #tpu.core_type<tc>, window_params = [{transform_indices = @transform_0, window_bounds = array<i64: 32, 9>}, {transform_indices = @transform_1, window_bounds = array<i64: 32, 1>}, {pipeline_mode = #tpu.pipeline_mode<synchronous>, transform_indices = @transform_2, window_bounds = array<i64: 1, 1>}, {pipeline_mode = #tpu.pipeline_mode<synchronous>, transform_indices = @transform_3, window_bounds = array<i64: 9, 512>}, {pipeline_mode = #tpu.pipeline_mode<synchronous>, transform_indices = @transform_4, window_bounds = array<i64: 1, 512>}, {pipeline_mode = #tpu.pipeline_mode<synchronous>, transform_indices = @transform_5, window_bounds = array<i64: 512, 256>}, {pipeline_mode = #tpu.pipeline_mode<synchronous>, transform_indices = @transform_6, window_bounds = array<i64: 1, 256>}, {pipeline_mode = #tpu.pipeline_mode<synchronous>, transform_indices = @transform_7, window_bounds = array<i64: 256, 128>}, {pipeline_mode = #tpu.pipeline_mode<synchronous>, transform_indices = @transform_8, window_bounds = array<i64: 1, 128>}, {pipeline_mode = #tpu.pipeline_mode<synchronous>, transform_indices = @transform_9, window_bounds = array<i64: 128, 2>}, {pipeline_mode = #tpu.pipeline_mode<synchronous>, transform_indices = @transform_10, window_bounds = array<i64: 1, 2>}, {transform_indices = @transform_11, window_bounds = array<i64: 32, 4>}]} {
    %c0 = arith.constant 0 : index
    %c0_0 = arith.constant 0 : index
    %0 = vector.load %arg1[%c0, %c0_0] : memref<32x9xf32, #tpu.memory_space<vmem>>, vector<32x9xf32>
    %1 = arith.truncf %0 : vector<32x9xf32> to vector<32x9xbf16>
    %c0_1 = arith.constant 0 : index
    %c0_2 = arith.constant 0 : index
    %2 = vector.load %arg4[%c0_1, %c0_2] : memref<9x512xbf16, #tpu.memory_space<vmem>>, vector<9x512xbf16>
    %cst = arith.constant dense<0.000000e+00> : vector<32x512xf32>
    %3 = tpu.matmul %1, %2, %cst {dimension_numbers = #tpu.dot_dimension_numbers<[1], [0], [0], [1], [0, 0, 1, 1], [], []>} : vector<32x9xbf16>, vector<9x512xbf16>, vector<32x512xf32> -> vector<32x512xf32>
    %c0_3 = arith.constant 0 : index
    %c0_4 = arith.constant 0 : index
    %4 = vector.load %arg5[%c0_3, %c0_4] : memref<1x512xf32, #tpu.memory_space<vmem>>, vector<1x512xf32>
    %5 = vector.broadcast %4 : vector<1x512xf32> to vector<32x512xf32>
    %6 = arith.addf %3, %5 : vector<32x512xf32>
    %cst_5 = arith.constant 0.000000e+00 : f32
    %7 = vector.broadcast %cst_5 : f32 to vector<32x512xf32>
    %8 = arith.cmpf ogt, %6, %7 : vector<32x512xf32>
    %9 = math.exp %6 : vector<32x512xf32>
    %cst_6 = arith.constant 1.000000e+00 : f32
    %10 = vector.broadcast %cst_6 : f32 to vector<32x512xf32>
    %11 = arith.subf %9, %10 : vector<32x512xf32>
    %cst_7 = arith.constant 1.67326319 : f32
    %12 = vector.broadcast %cst_7 : f32 to vector<32x512xf32>
    %13 = arith.mulf %12, %11 : vector<32x512xf32>
    %14 = arith.select %8, %6, %13 : vector<32x512xi1>, vector<32x512xf32>
    %cst_8 = arith.constant 1.05070102 : f32
    %15 = vector.broadcast %cst_8 : f32 to vector<32x512xf32>
    %16 = arith.mulf %15, %14 : vector<32x512xf32>
    %17 = arith.truncf %16 : vector<32x512xf32> to vector<32x512xbf16>
    %c0_9 = arith.constant 0 : index
    %c0_10 = arith.constant 0 : index
    %18 = vector.load %arg6[%c0_9, %c0_10] : memref<512x256xbf16, #tpu.memory_space<vmem>>, vector<512x256xbf16>
    %cst_11 = arith.constant dense<0.000000e+00> : vector<32x256xf32>
    %19 = tpu.matmul %17, %18, %cst_11 {dimension_numbers = #tpu.dot_dimension_numbers<[1], [0], [0], [1], [0, 0, 1, 1], [], []>} : vector<32x512xbf16>, vector<512x256xbf16>, vector<32x256xf32> -> vector<32x256xf32>
    %c0_12 = arith.constant 0 : index
    %c0_13 = arith.constant 0 : index
    %20 = vector.load %arg7[%c0_12, %c0_13] : memref<1x256xf32, #tpu.memory_space<vmem>>, vector<1x256xf32>
    %21 = vector.broadcast %20 : vector<1x256xf32> to vector<32x256xf32>
    %22 = arith.addf %19, %21 : vector<32x256xf32>
    %cst_14 = arith.constant 0.000000e+00 : f32
    %23 = vector.broadcast %cst_14 : f32 to vector<32x256xf32>
    %24 = arith.cmpf ogt, %22, %23 : vector<32x256xf32>
    %25 = math.exp %22 : vector<32x256xf32>
    %cst_15 = arith.constant 1.000000e+00 : f32
    %26 = vector.broadcast %cst_15 : f32 to vector<32x256xf32>
    %27 = arith.subf %25, %26 : vector<32x256xf32>
    %cst_16 = arith.constant 1.67326319 : f32
    %28 = vector.broadcast %cst_16 : f32 to vector<32x256xf32>
    %29 = arith.mulf %28, %27 : vector<32x256xf32>
    %30 = arith.select %24, %22, %29 : vector<32x256xi1>, vector<32x256xf32>
    %cst_17 = arith.constant 1.05070102 : f32
    %31 = vector.broadcast %cst_17 : f32 to vector<32x256xf32>
    %32 = arith.mulf %31, %30 : vector<32x256xf32>
    %33 = arith.truncf %32 : vector<32x256xf32> to vector<32x256xbf16>
    %c0_18 = arith.constant 0 : index
    %c0_19 = arith.constant 0 : index
    %34 = vector.load %arg8[%c0_18, %c0_19] : memref<256x128xbf16, #tpu.memory_space<vmem>>, vector<256x128xbf16>
    %cst_20 = arith.constant dense<0.000000e+00> : vector<32x128xf32>
    %35 = tpu.matmul %33, %34, %cst_20 {dimension_numbers = #tpu.dot_dimension_numbers<[1], [0], [0], [1], [0, 0, 1, 1], [], []>} : vector<32x256xbf16>, vector<256x128xbf16>, vector<32x128xf32> -> vector<32x128xf32>
    %c0_21 = arith.constant 0 : index
    %c0_22 = arith.constant 0 : index
    %36 = vector.load %arg9[%c0_21, %c0_22] : memref<1x128xf32, #tpu.memory_space<vmem>>, vector<1x128xf32>
    %37 = vector.broadcast %36 : vector<1x128xf32> to vector<32x128xf32>
    %38 = arith.addf %35, %37 : vector<32x128xf32>
    %cst_23 = arith.constant 0.000000e+00 : f32
    %39 = vector.broadcast %cst_23 : f32 to vector<32x128xf32>
    %40 = arith.cmpf ogt, %38, %39 : vector<32x128xf32>
    %41 = math.exp %38 : vector<32x128xf32>
    %cst_24 = arith.constant 1.000000e+00 : f32
    %42 = vector.broadcast %cst_24 : f32 to vector<32x128xf32>
    %43 = arith.subf %41, %42 : vector<32x128xf32>
    %cst_25 = arith.constant 1.67326319 : f32
    %44 = vector.broadcast %cst_25 : f32 to vector<32x128xf32>
    %45 = arith.mulf %44, %43 : vector<32x128xf32>
    %46 = arith.select %40, %38, %45 : vector<32x128xi1>, vector<32x128xf32>
    %cst_26 = arith.constant 1.05070102 : f32
    %47 = vector.broadcast %cst_26 : f32 to vector<32x128xf32>
    %48 = arith.mulf %47, %46 : vector<32x128xf32>
    %49 = arith.truncf %48 : vector<32x128xf32> to vector<32x128xbf16>
    %c0_27 = arith.constant 0 : index
    %c0_28 = arith.constant 0 : index
    %50 = vector.load %arg10[%c0_27, %c0_28] : memref<128x2xbf16, #tpu.memory_space<vmem>>, vector<128x2xbf16>
    %cst_29 = arith.constant dense<0.000000e+00> : vector<32x2xf32>
    %51 = tpu.matmul %49, %50, %cst_29 {dimension_numbers = #tpu.dot_dimension_numbers<[1], [0], [0], [1], [0, 0, 1, 1], [], []>} : vector<32x128xbf16>, vector<128x2xbf16>, vector<32x2xf32> -> vector<32x2xf32>
    %c0_30 = arith.constant 0 : index
    %c0_31 = arith.constant 0 : index
    %52 = vector.load %arg11[%c0_30, %c0_31] : memref<1x2xf32, #tpu.memory_space<vmem>>, vector<1x2xf32>
    %53 = vector.broadcast %52 : vector<1x2xf32> to vector<32x2xf32>
    %54 = arith.addf %51, %53 : vector<32x2xf32>
    %55 = vector.extract_strided_slice %54 {offsets = [0, 0], sizes = [32, 1], strides = [1, 1]} : vector<32x2xf32> to vector<32x1xf32>
    %c0_32 = arith.constant 0 : index
    %c0_33 = arith.constant 0 : index
    %56 = vector.load %arg3[%c0_32, %c0_33] : memref<1x1xf32, #tpu.memory_space<vmem>>, vector<1x1xf32>
    %c0_34 = arith.constant 0 : index
    %c0_35 = arith.constant 0 : index
    %57 = vector.load %arg2[%c0_34, %c0_35] : memref<32x1xf32, #tpu.memory_space<vmem>>, vector<32x1xf32>
    %58 = vector.broadcast %56 : vector<1x1xf32> to vector<32x1xf32>
    %59 = arith.mulf %58, %57 : vector<32x1xf32>
    %60 = arith.addf %55, %59 : vector<32x1xf32>
    %61 = arith.mulf %57, %57 : vector<32x1xf32>
    %cst_36 = arith.constant dense<0.000000e+00> : vector<32xf32>
    %62 = vector.multi_reduction <add>, %61, %cst_36 [1] : vector<32x1xf32> to vector<32xf32>
    %63 = vector.shape_cast %62 : vector<32xf32> to vector<32x1xf32>
    %cst_37 = arith.constant -5.000000e-01 : f32
    %64 = vector.broadcast %cst_37 : f32 to vector<32x1xf32>
    %65 = arith.mulf %64, %63 : vector<32x1xf32>
    %66 = math.log %56 : vector<1x1xf32>
    %cst_38 = arith.constant dense<0.000000e+00> : vector<1xf32>
    %67 = vector.multi_reduction <add>, %66, %cst_38 [1] : vector<1x1xf32> to vector<1xf32>
    %68 = vector.shape_cast %67 : vector<1xf32> to vector<1x1xf32>
    %69 = vector.broadcast %68 : vector<1x1xf32> to vector<32x1xf32>
    %70 = arith.subf %65, %69 : vector<32x1xf32>
    %cst_39 = arith.constant 0.918938517 : f32
    %71 = vector.broadcast %cst_39 : f32 to vector<32x1xf32>
    %72 = arith.subf %70, %71 : vector<32x1xf32>
    %c0_40 = arith.constant 0 : index
    %c0_41 = arith.constant 0 : index
    %73 = vector.load %arg12[%c0_40, %c0_41] : memref<32x4xf32, #tpu.memory_space<vmem>>, vector<32x2xf32>
    tpu.vector_store %arg12[%c0_40, %c0_41], %54 {strides = array<i32>} : memref<32x4xf32, #tpu.memory_space<vmem>>, vector<32x2xf32>,
    %c0_42 = arith.constant 0 : index
    %c2 = arith.constant 2 : index
    %74 = vector.load %arg12[%c0_42, %c2] : memref<32x4xf32, #tpu.memory_space<vmem>>, vector<32x1xf32>
    tpu.vector_store %arg12[%c0_42, %c2], %60 {strides = array<i32>} : memref<32x4xf32, #tpu.memory_space<vmem>>, vector<32x1xf32>,
    %c0_43 = arith.constant 0 : index
    %c3 = arith.constant 3 : index
    %75 = vector.load %arg12[%c0_43, %c3] : memref<32x4xf32, #tpu.memory_space<vmem>>, vector<32x1xf32>
    tpu.vector_store %arg12[%c0_43, %c3], %72 {strides = array<i32>} : memref<32x4xf32, #tpu.memory_space<vmem>>, vector<32x1xf32>,
    return
  }
  func.func @transform_0(%arg0: i32) -> (i32, i32) {
    %c0_i32 = arith.constant 0 : i32
    %c0_i32_0 = arith.constant 0 : i32
    return %arg0, %c0_i32 : i32, i32
  }
  func.func @transform_1(%arg0: i32) -> (i32, i32) {
    %c0_i32 = arith.constant 0 : i32
    %c0_i32_0 = arith.constant 0 : i32
    return %arg0, %c0_i32 : i32, i32
  }
  func.func @transform_2(%arg0: i32) -> (i32, i32) {
    %c0_i32 = arith.constant 0 : i32
    %c0_i32_0 = arith.constant 0 : i32
    %c0_i32_1 = arith.constant 0 : i32
    return %c0_i32, %c0_i32_0 : i32, i32
  }
  func.func @transform_3(%arg0: i32) -> (i32, i32) {
    %c0_i32 = arith.constant 0 : i32
    %c0_i32_0 = arith.constant 0 : i32
    %c0_i32_1 = arith.constant 0 : i32
    return %c0_i32, %c0_i32_0 : i32, i32
  }
  func.func @transform_4(%arg0: i32) -> (i32, i32) {
    %c0_i32 = arith.constant 0 : i32
    %c0_i32_0 = arith.constant 0 : i32
    %c0_i32_1 = arith.constant 0 : i32
    return %c0_i32, %c0_i32_0 : i32, i32
  }
  func.func @transform_5(%arg0: i32) -> (i32, i32) {
    %c0_i32 = arith.constant 0 : i32
    %c0_i32_0 = arith.constant 0 : i32
    %c0_i32_1 = arith.constant 0 : i32
    return %c0_i32, %c0_i32_0 : i32, i32
  }
  func.func @transform_6(%arg0: i32) -> (i32, i32) {
    %c0_i32 = arith.constant 0 : i32
    %c0_i32_0 = arith.constant 0 : i32
    %c0_i32_1 = arith.constant 0 : i32
    return %c0_i32, %c0_i32_0 : i32, i32
  }
  func.func @transform_7(%arg0: i32) -> (i32, i32) {
    %c0_i32 = arith.constant 0 : i32
    %c0_i32_0 = arith.constant 0 : i32
    %c0_i32_1 = arith.constant 0 : i32
    return %c0_i32, %c0_i32_0 : i32, i32
  }
  func.func @transform_8(%arg0: i32) -> (i32, i32) {
    %c0_i32 = arith.constant 0 : i32
    %c0_i32_0 = arith.constant 0 : i32
    %c0_i32_1 = arith.constant 0 : i32
    return %c0_i32, %c0_i32_0 : i32, i32
  }
  func.func @transform_9(%arg0: i32) -> (i32, i32) {
    %c0_i32 = arith.constant 0 : i32
    %c0_i32_0 = arith.constant 0 : i32
    %c0_i32_1 = arith.constant 0 : i32
    return %c0_i32, %c0_i32_0 : i32, i32
  }
  func.func @transform_10(%arg0: i32) -> (i32, i32) {
    %c0_i32 = arith.constant 0 : i32
    %c0_i32_0 = arith.constant 0 : i32
    %c0_i32_1 = arith.constant 0 : i32
    return %c0_i32, %c0_i32_0 : i32, i32
  }
  func.func @transform_11(%arg0: i32) -> (i32, i32) {
    %c0_i32 = arith.constant 0 : i32
    %c0_i32_0 = arith.constant 0 : i32
    return %arg0, %c0_i32 : i32, i32
  }
}

</mosaic_0001>

<llo_original>
// kernel: tpu_custom_call.1
$region0: #{tpu_custom_call.1}
  #allocation0 [shape = 'u32[]', space=smem, size = 0x4, offset = 0x4, fixed_abs, tag = 'smem constant byte address 0x4 - core index']
  #allocation1 [shape = 'u32[144,128]{1,0:T(1,128)}', space=vmem, size = 0x12000, scoped, tag = 'internal scratch']
  #allocation2 [shape = 'f32[1,1]{1,0:T(1,128)S(1)}', space=vmem, size = 0x200, scoped, tag = 'scoped memory for tpu_custom_call.1']
  %s0 = inlined_call_operand.vmem [shape: f32[32,9], index: 0, kind: input, shape index: {}]
  %s1 = inlined_call_operand.vmem [shape: f32[32,1], index: 1, kind: input, shape index: {}]
  %s2 = inlined_call_operand.<no memory space> [shape: f32[1,1], index: 2, kind: input, shape index: {}]
  %s3 = inlined_call_operand.hbm [shape: bf16[9,512], index: 3, kind: input, shape index: {}]
  %s4 = inlined_call_operand.vmem [shape: f32[1,512], index: 4, kind: input, shape index: {}]
  %s5 = inlined_call_operand.hbm [shape: bf16[512,256], index: 5, kind: input, shape index: {}]
  %s6 = inlined_call_operand.vmem [shape: f32[1,256], index: 6, kind: input, shape index: {}]
  %s7 = inlined_call_operand.vmem [shape: bf16[256,128], index: 7, kind: input, shape index: {}]
  %s8 = inlined_call_operand.vmem [shape: f32[1,128], index: 8, kind: input, shape index: {}]
  %s9 = inlined_call_operand.vmem [shape: bf16[128,2], index: 9, kind: input, shape index: {}]
  %s10 = inlined_call_operand.vmem [shape: f32[1,2], index: 10, kind: input, shape index: {}]
  %s11 = inlined_call_operand.vmem [shape: f32[32,4], index: 11, kind: output, shape index: {}]
  %s12 = sld [smem:[#allocation0]]
  $region62: #{tpu_custom_call.1} parent=0
    _
  %s14 = ssub.s32 1, %s12
  %s15 = scalar_select 0, %s14, %s12
  %v16 = vstv %s2
  %17 = vst [vmem:[#allocation2] sm:$0x1] %v16
  $region1: #{tpu_custom_call.1} parent=0
    #allocation3 [shape = 'u8[16384]{0}', space=vmem, size = 0x4000, scoped, tag = 'input window, operand 3, single buffered']
    #allocation4 [shape = 's32[1]{0}', space=sflag, size = 0x4, scoped, tag = 'scoped memory for tpu_custom_call.1']
    #allocation5 [shape = 'u8[262144]{0}', space=vmem, size = 0x40000, scoped, tag = 'input window, operand 5, single buffered']
    #allocation6 [shape = 's32[1]{0}', space=sflag, size = 0x4, scoped, tag = 'scoped memory for tpu_custom_call.1']
    %18 = vsyncpa [#allocation4], 0
    %19 = vsyncpa [#allocation6], 0
    // Predicated region
    $region2: #{tpu_custom_call.1} parent=1 // pred_check
      _
    $region3: #{tpu_custom_call.1} parent=1 // pred_check_branch
      %21 = sbr.rel (0) target = $region5
    $region4: #{tpu_custom_call.1} parent=1 // pred_region
      _
    $region5: #{tpu_custom_call.1} parent=1 // pred_fallthru
      _
    // Predicated region
    $region6: #{tpu_custom_call.1} parent=1 // pred_check
      _
    $region7: #{tpu_custom_call.1} parent=1 // pred_check_branch
      %23 = sbr.rel (0) target = $region9
    $region8: #{tpu_custom_call.1} parent=1 // pred_region
      _
    $region9: #{tpu_custom_call.1} parent=1 // pred_fallthru
      _
    // Predicated region
    $region10: #{tpu_custom_call.1} parent=1 // pred_check
      _
    $region11: #{tpu_custom_call.1} parent=1 // pred_check_branch
      %25 = sbr.rel (0) target = $region13
    $region12: #{tpu_custom_call.1} parent=1 // pred_region
      _
    $region13: #{tpu_custom_call.1} parent=1 // pred_fallthru
      _
    // Predicated region
    $region14: #{tpu_custom_call.1} parent=1 // pred_check
      _
    $region15: #{tpu_custom_call.1} parent=1 // pred_check_branch
      %27 = sbr.rel (0) target = $region17
    $region16: #{tpu_custom_call.1} parent=1 // pred_region
      %s29 = ssub.s32 512, 512
      %30 = vsyncadd [#allocation4], %s29
      %s31 = sshll.u32 [#allocation3], 4
      %s32 = int_to_ptr.vmem [resolvable:$true] %s31
      %37 = dma.hbm_to_vmem [thread:$0]  %s3, 512, %s32, [#allocation4], 256, 256, 16
    $region17: #{tpu_custom_call.1} parent=1 // pred_fallthru
      _
    // Predicated region
    $region18: #{tpu_custom_call.1} parent=1 // pred_check
      _
    $region19: #{tpu_custom_call.1} parent=1 // pred_check_branch
      %39 = sbr.rel (0) target = $region21
    $region20: #{tpu_custom_call.1} parent=1 // pred_region
      _
    $region21: #{tpu_custom_call.1} parent=1 // pred_fallthru
      _
    // Predicated region
    $region22: #{tpu_custom_call.1} parent=1 // pred_check
      _
    $region23: #{tpu_custom_call.1} parent=1 // pred_check_branch
      %41 = sbr.rel (0) target = $region25
    $region24: #{tpu_custom_call.1} parent=1 // pred_region
      %s43 = ssub.s32 8192, 8192
      %44 = vsyncadd [#allocation6], %s43
      %s45 = sshll.u32 [#allocation5], 4
      %s46 = int_to_ptr.vmem [resolvable:$true] %s45
      %51 = dma.hbm_to_vmem [thread:$0]  %s5, 8192, %s46, [#allocation6], 128, 128, 8
    $region25: #{tpu_custom_call.1} parent=1 // pred_fallthru
      _
    // Predicated region
    $region26: #{tpu_custom_call.1} parent=1 // pred_check
      _
    $region27: #{tpu_custom_call.1} parent=1 // pred_check_branch
      %53 = sbr.rel (0) target = $region29
    $region28: #{tpu_custom_call.1} parent=1 // pred_region
      _
    $region29: #{tpu_custom_call.1} parent=1 // pred_fallthru
      _
    // Predicated region
    $region30: #{tpu_custom_call.1} parent=1 // pred_check
      _
    $region31: #{tpu_custom_call.1} parent=1 // pred_check_branch
      %55 = sbr.rel (0) target = $region33
    $region32: #{tpu_custom_call.1} parent=1 // pred_region
      _
    $region33: #{tpu_custom_call.1} parent=1 // pred_fallthru
      _
    // Predicated region
    $region34: #{tpu_custom_call.1} parent=1 // pred_check
      _
    $region35: #{tpu_custom_call.1} parent=1 // pred_check_branch
      %57 = sbr.rel (0) target = $region37
    $region36: #{tpu_custom_call.1} parent=1 // pred_region
      _
    $region37: #{tpu_custom_call.1} parent=1 // pred_fallthru
      _
    // Predicated region
    $region38: #{tpu_custom_call.1} parent=1 // pred_check
      _
    $region39: #{tpu_custom_call.1} parent=1 // pred_check_branch
      %59 = sbr.rel (0) target = $region41
    $region40: #{tpu_custom_call.1} parent=1 // pred_region
      _
    $region41: #{tpu_custom_call.1} parent=1 // pred_fallthru
      _
    // Predicated region
    $region42: #{tpu_custom_call.1} parent=1 // pred_check
      _
    $region43: #{tpu_custom_call.1} parent=1 // pred_check_branch
      %61 = sbr.rel (0) target = $region45
    $region44: #{tpu_custom_call.1} parent=1 // pred_region
      _
    $region45: #{tpu_custom_call.1} parent=1 // pred_fallthru
      _
    // Predicated region
    $region46: #{tpu_custom_call.1} parent=1 // pred_check
      _
    $region47: #{tpu_custom_call.1} parent=1 // pred_check_branch
      %63 = sbr.rel (0) target = $region49
    $region48: #{tpu_custom_call.1} parent=1 // pred_region
      %64 = dma.done [#allocation4], 512
    $region49: #{tpu_custom_call.1} parent=1 // pred_fallthru
      _
    // Predicated region
    $region50: #{tpu_custom_call.1} parent=1 // pred_check
      _
    $region51: #{tpu_custom_call.1} parent=1 // pred_check_branch
      %66 = sbr.rel (0) target = $region53
    $region52: #{tpu_custom_call.1} parent=1 // pred_region
      %67 = dma.done [#allocation6], 8192
    $region53: #{tpu_custom_call.1} parent=1 // pred_fallthru
      _
    %v69 = vld [vmem:[%s0] sm:$0xff]
    %v70 = vld [vmem:[%s0 + $0x8] sm:$0xff]
    %v71 = vld [vmem:[%s0 + $0x10] sm:$0xff]
    %v72 = vld [vmem:[%s0 + $0x18] sm:$0xff]
    %v73 = vpack.c.bf16 %v70, %v69
    %v74 = vpack.c.bf16 %v72, %v71
    %v75 = vld [vmem:[#allocation3] sm:$0xff]
    %v76 = vld [vmem:[#allocation3 + $0x8] sm:$0xff]
    %v77 = vld [vmem:[#allocation3 + $0x10] sm:$0x11]
    %v78 = vld [vmem:[#allocation3 + $0x18] sm:$0x11]
    %v79 = vld [vmem:[%s4] sm:$0xf]
    %v81 = vlaneseq
    %v82 = vshrl.u32 %v81, 7
    %v83 = vsub.s32 0, %v82
    %v84 = vrot.slane %v79, %v83
    %v85 = vlaneseq
    %v86 = vshrl.u32 %v85, 7
    %v87 = vsub.s32 1, %v86
    %v88 = vrot.slane %v79, %v87
    %v89 = vlaneseq
    %v90 = vshrl.u32 %v89, 7
    %v91 = vsub.s32 2, %v90
    %v92 = vrot.slane %v79, %v91
    %v93 = vlaneseq
    %v94 = vshrl.u32 %v93, 7
    %v95 = vsub.s32 3, %v94
    %v96 = vrot.slane %v79, %v95
    %v105 = vunpack.c.l.b16 %v75
    %v106 = vunpack.c.h.b16 %v75
    %v107 = vunpack.c.l.b16 %v76
    %v108 = vunpack.c.h.b16 %v76
    %v109 = vunpack.c.l.b16 %v77
    %v110 = vunpack.c.h.b16 %v77
    %v111 = vunpack.c.l.b16 %v78
    %v112 = vunpack.c.h.b16 %v78
    %v113 = vpack.c.b16 %v109, %v105
    %v114 = vpack.c.b16 %v110, %v106
    %v115 = vpack.c.b16 %v111, %v107
    %v116 = vpack.c.b16 %v112, %v108
    %vm117 = vcmask 72704
    %v119 = vsel %vm117, %v73, 0
    %v122 = vsel %vm117, %v74, 0
    %vm124 = vcmask 1043456
    %vm125 = vcmask 1044480
    %v126 = vsel %vm124, 4294967295, 65535
    %v127 = vsel %vm125, %v126, 0
    %v129 = vand.u32 %v113, %v127
    %v132 = vand.u32 %v114, %v127
    %v135 = vand.u32 %v115, %v127
    %v138 = vand.u32 %v116, %v127
    %140 = vmatprep.subr.bf16.mxu0 0
    %141 = vmatpush1.bf16.msra.mxu0 0
    %142 = vmatprep.subr.bf16.mxu0 0
    %143 = vmatpush1.bf16.msra.mxu0 0
    %144 = vmatprep.subr.bf16.mxu0 0
    %145 = vmatpush1.bf16.msra.mxu0 0
    %146 = vmatprep.subr.bf16.mxu0 0
    %147 = vmatpush1.bf16.msra.mxu0 0
    %148 = vmatprep.subr.bf16.mxu0 0
    %149 = vmatpush1.bf16.msra.mxu0 0
    %150 = vmatprep.subr.bf16.mxu0 0
    %151 = vmatpush1.bf16.msra.mxu0 0
    %152 = vmatprep.subr.bf16.mxu0 0
    %153 = vmatpush1.bf16.msra.mxu0 0
    %154 = vmatprep.subr.bf16.mxu0 %v132
    %155 = vmatpush1.bf16.msra.mxu0 %v129
    %156 = vmatprep.subr.bf16.mxu0 0
    %157 = vmatpush2.bf16.msra.mxu0 0
    %158 = vmatprep.subr.bf16.mxu0 0
    %159 = vmatpush2.bf16.msra.mxu0 0
    %160 = vmatprep.subr.bf16.mxu0 0
    %161 = vmatpush2.bf16.msra.mxu0 0
    %162 = vmatprep.subr.bf16.mxu0 0
    %163 = vmatpush2.bf16.msra.mxu0 0
    %164 = vmatprep.subr.bf16.mxu0 0
    %165 = vmatpush2.bf16.msra.mxu0 0
    %166 = vmatprep.subr.bf16.mxu0 0
    %167 = vmatpush2.bf16.msra.mxu0 0
    %168 = vmatprep.subr.bf16.mxu0 0
    %169 = vmatpush2.bf16.msra.mxu0 0
    %170 = vmatprep.subr.bf16.mxu0 0
    %171 = vmatpush2.bf16.msra.mxu0 0
    %172 = vmatprep.mubr.bf16.mxu0 0
    %173 = vmatmul.mubr.bf16.gmra.mxu0 %v119
    %v174 = vpop.f32.mrf.mxu0
    %v175 = vadd.f32 %v84, %v174
    %v176 = vpop.f32.mrf.mxu0
    %v177 = vadd.f32 %v88, %v176
    %v178 = vpop.f32.mrf.mxu0
    %v179 = vadd.f32 %v84, %v178
    %v180 = vpop.f32.mrf.mxu0
    %v181 = vadd.f32 %v88, %v180
    %182 = vmatprep.mubr.bf16.mxu0 0
    %183 = vmatmul.mubr.bf16.gmra.mxu0 %v122
    %v184 = vpop.f32.mrf.mxu0
    %v185 = vadd.f32 %v84, %v184
    %v186 = vpop.f32.mrf.mxu0
    %v187 = vadd.f32 %v88, %v186
    %v188 = vpop.f32.mrf.mxu0
    %v189 = vadd.f32 %v84, %v188
    %v190 = vpop.f32.mrf.mxu0
    %v191 = vadd.f32 %v88, %v190
    %192 = vdwg.mxu0
    %193 = vmatprep.subr.bf16.mxu0 0
    %194 = vmatpush1.bf16.msra.mxu0 0
    %195 = vmatprep.subr.bf16.mxu0 0
    %196 = vmatpush1.bf16.msra.mxu0 0
    %197 = vmatprep.subr.bf16.mxu0 0
    %198 = vmatpush1.bf16.msra.mxu0 0
    %199 = vmatprep.subr.bf16.mxu0 0
    %200 = vmatpush1.bf16.msra.mxu0 0
    %201 = vmatprep.subr.bf16.mxu0 0
    %202 = vmatpush1.bf16.msra.mxu0 0
    %203 = vmatprep.subr.bf16.mxu0 0
    %204 = vmatpush1.bf16.msra.mxu0 0
    %205 = vmatprep.subr.bf16.mxu0 0
    %206 = vmatpush1.bf16.msra.mxu0 0
    %207 = vmatprep.subr.bf16.mxu0 %v138
    %208 = vmatpush1.bf16.msra.mxu0 %v135
    %209 = vmatprep.subr.bf16.mxu0 0
    %210 = vmatpush2.bf16.msra.mxu0 0
    %211 = vmatprep.subr.bf16.mxu0 0
    %212 = vmatpush2.bf16.msra.mxu0 0
    %213 = vmatprep.subr.bf16.mxu0 0
    %214 = vmatpush2.bf16.msra.mxu0 0
    %215 = vmatprep.subr.bf16.mxu0 0
    %216 = vmatpush2.bf16.msra.mxu0 0
    %217 = vmatprep.subr.bf16.mxu0 0
    %218 = vmatpush2.bf16.msra.mxu0 0
    %219 = vmatprep.subr.bf16.mxu0 0
    %220 = vmatpush2.bf16.msra.mxu0 0
    %221 = vmatprep.subr.bf16.mxu0 0
    %222 = vmatpush2.bf16.msra.mxu0 0
    %223 = vmatprep.subr.bf16.mxu0 0
    %224 = vmatpush2.bf16.msra.mxu0 0
    %225 = vmatprep.mubr.bf16.mxu0 0
    %226 = vmatmul.mubr.bf16.gmra.mxu0 %v119
    %v227 = vpop.f32.mrf.mxu0
    %v228 = vadd.f32 %v92, %v227
    %v229 = vpop.f32.mrf.mxu0
    %v230 = vadd.f32 %v96, %v229
    %v231 = vpop.f32.mrf.mxu0
    %v232 = vadd.f32 %v92, %v231
    %v233 = vpop.f32.mrf.mxu0
    %v234 = vadd.f32 %v96, %v233
    %235 = vmatprep.mubr.bf16.mxu0 0
    %236 = vmatmul.mubr.bf16.gmra.mxu0 %v122
    %v237 = vpop.f32.mrf.mxu0
    %v238 = vadd.f32 %v92, %v237
    %v239 = vpop.f32.mrf.mxu0
    %v240 = vadd.f32 %v96, %v239
    %v241 = vpop.f32.mrf.mxu0
    %v242 = vadd.f32 %v92, %v241
    %v243 = vpop.f32.mrf.mxu0
    %v244 = vadd.f32 %v96, %v243
    %245 = vdwg.mxu0
    %vm246 = vcmp.gt.f32.partialorder %v175, 0.0
    %vm247 = vcmp.gt.f32.partialorder %v177, 0.0
    %vm248 = vcmp.gt.f32.partialorder %v228, 0.0
    %vm249 = vcmp.gt.f32.partialorder %v230, 0.0
    %vm250 = vcmp.gt.f32.partialorder %v179, 0.0
    %vm251 = vcmp.gt.f32.partialorder %v181, 0.0
    %vm252 = vcmp.gt.f32.partialorder %v232, 0.0
    %vm253 = vcmp.gt.f32.partialorder %v234, 0.0
    %vm254 = vcmp.gt.f32.partialorder %v185, 0.0
    %vm255 = vcmp.gt.f32.partialorder %v187, 0.0
    %vm256 = vcmp.gt.f32.partialorder %v238, 0.0
    %vm257 = vcmp.gt.f32.partialorder %v240, 0.0
    %vm258 = vcmp.gt.f32.partialorder %v189, 0.0
    %vm259 = vcmp.gt.f32.partialorder %v191, 0.0
    %vm260 = vcmp.gt.f32.partialorder %v242, 0.0
    %vm261 = vcmp.gt.f32.partialorder %v244, 0.0
    %v262 = vmul.f32 %v175, 1.442695
    %v263 = vpow.pop %v262
    %v264 = vmul.f32 %v177, 1.442695
    %v265 = vpow.pop %v264
    %v266 = vmul.f32 %v228, 1.442695
    %v267 = vpow.pop %v266
    %v268 = vmul.f32 %v230, 1.442695
    %v269 = vpow.pop %v268
    %v270 = vmul.f32 %v179, 1.442695
    %v271 = vpow.pop %v270
    %v272 = vmul.f32 %v181, 1.442695
    %v273 = vpow.pop %v272
    %v274 = vmul.f32 %v232, 1.442695
    %v275 = vpow.pop %v274
    %v276 = vmul.f32 %v234, 1.442695
    %v277 = vpow.pop %v276
    %v278 = vmul.f32 %v185, 1.442695
    %v279 = vpow.pop %v278
    %v280 = vmul.f32 %v187, 1.442695
    %v281 = vpow.pop %v280
    %v282 = vmul.f32 %v238, 1.442695
    %v283 = vpow.pop %v282
    %v284 = vmul.f32 %v240, 1.442695
    %v285 = vpow.pop %v284
    %v286 = vmul.f32 %v189, 1.442695
    %v287 = vpow.pop %v286
    %v288 = vmul.f32 %v191, 1.442695
    %v289 = vpow.pop %v288
    %v290 = vmul.f32 %v242, 1.442695
    %v291 = vpow.pop %v290
    %v292 = vmul.f32 %v244, 1.442695
    %v293 = vpow.pop %v292
    %v294 = vsub.f32 %v263, 1.0
    %v295 = vsub.f32 %v265, 1.0
    %v296 = vsub.f32 %v267, 1.0
    %v297 = vsub.f32 %v269, 1.0
    %v298 = vsub.f32 %v271, 1.0
    %v299 = vsub.f32 %v273, 1.0
    %v300 = vsub.f32 %v275, 1.0
    %v301 = vsub.f32 %v277, 1.0
    %v302 = vsub.f32 %v279, 1.0
    %v303 = vsub.f32 %v281, 1.0
    %v304 = vsub.f32 %v283, 1.0
    %v305 = vsub.f32 %v285, 1.0
    %v306 = vsub.f32 %v287, 1.0
    %v307 = vsub.f32 %v289, 1.0
    %v308 = vsub.f32 %v291, 1.0
    %v309 = vsub.f32 %v293, 1.0
    %v310 = vmul.f32 %v294, 1.6732632
    %v311 = vmul.f32 %v295, 1.6732632
    %v312 = vmul.f32 %v296, 1.6732632
    %v313 = vmul.f32 %v297, 1.6732632
    %v314 = vmul.f32 %v298, 1.6732632
    %v315 = vmul.f32 %v299, 1.6732632
    %v316 = vmul.f32 %v300, 1.6732632
    %v317 = vmul.f32 %v301, 1.6732632
    %v318 = vmul.f32 %v302, 1.6732632
    %v319 = vmul.f32 %v303, 1.6732632
    %v320 = vmul.f32 %v304, 1.6732632
    %v321 = vmul.f32 %v305, 1.6732632
    %v322 = vmul.f32 %v306, 1.6732632
    %v323 = vmul.f32 %v307, 1.6732632
    %v324 = vmul.f32 %v308, 1.6732632
    %v325 = vmul.f32 %v309, 1.6732632
    %v326 = vsel %vm246, %v175, %v310
    %v327 = vsel %vm247, %v177, %v311
    %v328 = vsel %vm248, %v228, %v312
    %v329 = vsel %vm249, %v230, %v313
    %v330 = vsel %vm250, %v179, %v314
    %v331 = vsel %vm251, %v181, %v315
    %v332 = vsel %vm252, %v232, %v316
    %v333 = vsel %vm253, %v234, %v317
    %v334 = vsel %vm254, %v185, %v318
    %v335 = vsel %vm255, %v187, %v319
    %v336 = vsel %vm256, %v238, %v320
    %v337 = vsel %vm257, %v240, %v321
    %v338 = vsel %vm258, %v189, %v322
    %v339 = vsel %vm259, %v191, %v323
    %v340 = vsel %vm260, %v242, %v324
    %v341 = vsel %vm261, %v244, %v325
    %v342 = vmul.f32 %v326, 1.050701
    %v343 = vmul.f32 %v327, 1.050701
    %v344 = vmul.f32 %v328, 1.050701
    %v345 = vmul.f32 %v329, 1.050701
    %v346 = vmul.f32 %v330, 1.050701
    %v347 = vmul.f32 %v331, 1.050701
    %v348 = vmul.f32 %v332, 1.050701
    %v349 = vmul.f32 %v333, 1.050701
    %v350 = vmul.f32 %v334, 1.050701
    %v351 = vmul.f32 %v335, 1.050701
    %v352 = vmul.f32 %v336, 1.050701
    %v353 = vmul.f32 %v337, 1.050701
    %v354 = vmul.f32 %v338, 1.050701
    %v355 = vmul.f32 %v339, 1.050701
    %v356 = vmul.f32 %v340, 1.050701
    %v357 = vmul.f32 %v341, 1.050701
    %v358 = vpack.c.bf16 %v346, %v342
    %v359 = vpack.c.bf16 %v347, %v343
    %v360 = vpack.c.bf16 %v348, %v344
    %v361 = vpack.c.bf16 %v349, %v345
    %v362 = vpack.c.bf16 %v354, %v350
    %v363 = vpack.c.bf16 %v355, %v351
    %v364 = vpack.c.bf16 %v356, %v352
    %v365 = vpack.c.bf16 %v357, %v353
    %v366 = vld [vmem:[#allocation5] sm:$0xff]
    %v367 = vld [vmem:[#allocation5 + $0x8] sm:$0xff]
    %v368 = vld [vmem:[#allocation5 + $0x10] sm:$0xff]
    %v369 = vld [vmem:[#allocation5 + $0x18] sm:$0xff]
    %v370 = vld [vmem:[#allocation5 + $0x20] sm:$0xff]
    %v371 = vld [vmem:[#allocation5 + $0x28] sm:$0xff]
    %v372 = vld [vmem:[#allocation5 + $0x30] sm:$0xff]
    %v373 = vld [vmem:[#allocation5 + $0x38] sm:$0xff]
    %v374 = vld [vmem:[#allocation5 + $0x40] sm:$0xff]
    %v375 = vld [vmem:[#allocation5 + $0x48] sm:$0xff]
    %v376 = vld [vmem:[#allocation5 + $0x50] sm:$0xff]
    %v377 = vld [vmem:[#allocation5 + $0x58] sm:$0xff]
    %v378 = vld [vmem:[#allocation5 + $0x60] sm:$0xff]
    %v379 = vld [vmem:[#allocation5 + $0x68] sm:$0xff]
    %v380 = vld [vmem:[#allocation5 + $0x70] sm:$0xff]
    %v381 = vld [vmem:[#allocation5 + $0x78] sm:$0xff]
    %v382 = vld [vmem:[#allocation5 + $0x80] sm:$0xff]
    %v383 = vld [vmem:[#allocation5 + $0x88] sm:$0xff]
    %v384 = vld [vmem:[#allocation5 + $0x90] sm:$0xff]
    %v385 = vld [vmem:[#allocation5 + $0x98] sm:$0xff]
    %v386 = vld [vmem:[#allocation5 + $0xa0] sm:$0xff]
    %v387 = vld [vmem:[#allocation5 + $0xa8] sm:$0xff]
    %v388 = vld [vmem:[#allocation5 + $0xb0] sm:$0xff]
    %v389 = vld [vmem:[#allocation5 + $0xb8] sm:$0xff]
    %v390 = vld [vmem:[#allocation5 + $0xc0] sm:$0xff]
    %v391 = vld [vmem:[#allocation5 + $0xc8] sm:$0xff]
    %v392 = vld [vmem:[#allocation5 + $0xd0] sm:$0xff]
    %v393 = vld [vmem:[#allocation5 + $0xd8] sm:$0xff]
    %v394 = vld [vmem:[#allocation5 + $0xe0] sm:$0xff]
    %v395 = vld [vmem:[#allocation5 + $0xe8] sm:$0xff]
    %v396 = vld [vmem:[#allocation5 + $0xf0] sm:$0xff]
    %v397 = vld [vmem:[#allocation5 + $0xf8] sm:$0xff]
    %v398 = vld [vmem:[#allocation5 + $0x100] sm:$0xff]
    %v399 = vld [vmem:[#allocation5 + $0x108] sm:$0xff]
    %v400 = vld [vmem:[#allocation5 + $0x110] sm:$0xff]
    %v401 = vld [vmem:[#allocation5 + $0x118] sm:$0xff]
    %v402 = vld [vmem:[#allocation5 + $0x120] sm:$0xff]
    %v403 = vld [vmem:[#allocation5 + $0x128] sm:$0xff]
    %v404 = vld [vmem:[#allocation5 + $0x130] sm:$0xff]
    %v405 = vld [vmem:[#allocation5 + $0x138] sm:$0xff]
    %v406 = vld [vmem:[#allocation5 + $0x140] sm:$0xff]
    %v407 = vld [vmem:[#allocation5 + $0x148] sm:$0xff]
    %v408 = vld [vmem:[#allocation5 + $0x150] sm:$0xff]
    %v409 = vld [vmem:[#allocation5 + $0x158] sm:$0xff]
    %v410 = vld [vmem:[#allocation5 + $0x160] sm:$0xff]
    %v411 = vld [vmem:[#allocation5 + $0x168] sm:$0xff]
    %v412 = vld [vmem:[#allocation5 + $0x170] sm:$0xff]
    %v413 = vld [vmem:[#allocation5 + $0x178] sm:$0xff]
    %v414 = vld [vmem:[#allocation5 + $0x180] sm:$0xff]
    %v415 = vld [vmem:[#allocation5 + $0x188] sm:$0xff]
    %v416 = vld [vmem:[#allocation5 + $0x190] sm:$0xff]
    %v417 = vld [vmem:[#allocation5 + $0x198] sm:$0xff]
    %v418 = vld [vmem:[#allocation5 + $0x1a0] sm:$0xff]
    %v419 = vld [vmem:[#allocation5 + $0x1a8] sm:$0xff]
    %v420 = vld [vmem:[#allocation5 + $0x1b0] sm:$0xff]
    %v421 = vld [vmem:[#allocation5 + $0x1b8] sm:$0xff]
    %v422 = vld [vmem:[#allocation5 + $0x1c0] sm:$0xff]
    %v423 = vld [vmem:[#allocation5 + $0x1c8] sm:$0xff]
    %v424 = vld [vmem:[#allocation5 + $0x1d0] sm:$0xff]
    %v425 = vld [vmem:[#allocation5 + $0x1d8] sm:$0xff]
    %v426 = vld [vmem:[#allocation5 + $0x1e0] sm:$0xff]
    %v427 = vld [vmem:[#allocation5 + $0x1e8] sm:$0xff]
    %v428 = vld [vmem:[#allocation5 + $0x1f0] sm:$0xff]
    %v429 = vld [vmem:[#allocation5 + $0x1f8] sm:$0xff]
    %v430 = vld [vmem:[%s6] sm:$0x3]
    %v432 = vlaneseq
    %v433 = vshrl.u32 %v432, 7
    %v434 = vsub.s32 0, %v433
    %v435 = vrot.slane %v430, %v434
    %v436 = vlaneseq
    %v437 = vshrl.u32 %v436, 7
    %v438 = vsub.s32 1, %v437
    %v439 = vrot.slane %v430, %v438
    %v506 = vunpack.c.l.b16 %v366
    %v507 = vunpack.c.h.b16 %v366
    %v508 = vunpack.c.l.b16 %v367
    %v509 = vunpack.c.h.b16 %v367
    %v510 = vunpack.c.l.b16 %v368
    %v511 = vunpack.c.h.b16 %v368
    %v512 = vunpack.c.l.b16 %v369
    %v513 = vunpack.c.h.b16 %v369
    %v514 = vunpack.c.l.b16 %v370
    %v515 = vunpack.c.h.b16 %v370
    %v516 = vunpack.c.l.b16 %v371
    %v517 = vunpack.c.h.b16 %v371
    %v518 = vunpack.c.l.b16 %v372
    %v519 = vunpack.c.h.b16 %v372
    %v520 = vunpack.c.l.b16 %v373
    %v521 = vunpack.c.h.b16 %v373
    %v522 = vunpack.c.l.b16 %v374
    %v523 = vunpack.c.h.b16 %v374
    %v524 = vunpack.c.l.b16 %v375
    %v525 = vunpack.c.h.b16 %v375
    %v526 = vunpack.c.l.b16 %v376
    %v527 = vunpack.c.h.b16 %v376
    %v528 = vunpack.c.l.b16 %v377
    %v529 = vunpack.c.h.b16 %v377
    %v530 = vunpack.c.l.b16 %v378
    %v531 = vunpack.c.h.b16 %v378
    %v532 = vunpack.c.l.b16 %v379
    %v533 = vunpack.c.h.b16 %v379
    %v534 = vunpack.c.l.b16 %v380
    %v535 = vunpack.c.h.b16 %v380
    %v536 = vunpack.c.l.b16 %v381
    %v537 = vunpack.c.h.b16 %v381
    %v538 = vunpack.c.l.b16 %v382
    %v539 = vunpack.c.h.b16 %v382
    %v540 = vunpack.c.l.b16 %v383
    %v541 = vunpack.c.h.b16 %v383
    %v542 = vunpack.c.l.b16 %v384
    %v543 = vunpack.c.h.b16 %v384
    %v544 = vunpack.c.l.b16 %v385
    %v545 = vunpack.c.h.b16 %v385
    %v546 = vunpack.c.l.b16 %v386
    %v547 = vunpack.c.h.b16 %v386
    %v548 = vunpack.c.l.b16 %v387
    %v549 = vunpack.c.h.b16 %v387
    %v550 = vunpack.c.l.b16 %v388
    %v551 = vunpack.c.h.b16 %v388
    %v552 = vunpack.c.l.b16 %v389
    %v553 = vunpack.c.h.b16 %v389
    %v554 = vunpack.c.l.b16 %v390
    %v555 = vunpack.c.h.b16 %v390
    %v556 = vunpack.c.l.b16 %v391
    %v557 = vunpack.c.h.b16 %v391
    %v558 = vunpack.c.l.b16 %v392
    %v559 = vunpack.c.h.b16 %v392
    %v560 = vunpack.c.l.b16 %v393
    %v561 = vunpack.c.h.b16 %v393
    %v562 = vunpack.c.l.b16 %v394
    %v563 = vunpack.c.h.b16 %v394
    %v564 = vunpack.c.l.b16 %v395
    %v565 = vunpack.c.h.b16 %v395
    %v566 = vunpack.c.l.b16 %v396
    %v567 = vunpack.c.h.b16 %v396
    %v568 = vunpack.c.l.b16 %v397
    %v569 = vunpack.c.h.b16 %v397
    %v570 = vunpack.c.l.b16 %v398
    %v571 = vunpack.c.h.b16 %v398
    %v572 = vunpack.c.l.b16 %v399
    %v573 = vunpack.c.h.b16 %v399
    %v574 = vunpack.c.l.b16 %v400
    %v575 = vunpack.c.h.b16 %v400
    %v576 = vunpack.c.l.b16 %v401
    %v577 = vunpack.c.h.b16 %v401
    %v578 = vunpack.c.l.b16 %v402
    %v579 = vunpack.c.h.b16 %v402
    %v580 = vunpack.c.l.b16 %v403
    %v581 = vunpack.c.h.b16 %v403
    %v582 = vunpack.c.l.b16 %v404
    %v583 = vunpack.c.h.b16 %v404
    %v584 = vunpack.c.l.b16 %v405
    %v585 = vunpack.c.h.b16 %v405
    %v586 = vunpack.c.l.b16 %v406
    %v587 = vunpack.c.h.b16 %v406
    %v588 = vunpack.c.l.b16 %v407
    %v589 = vunpack.c.h.b16 %v407
    %v590 = vunpack.c.l.b16 %v408
    %v591 = vunpack.c.h.b16 %v408
    %v592 = vunpack.c.l.b16 %v409
    %v593 = vunpack.c.h.b16 %v409
    %v594 = vunpack.c.l.b16 %v410
    %v595 = vunpack.c.h.b16 %v410
    %v596 = vunpack.c.l.b16 %v411
    %v597 = vunpack.c.h.b16 %v411
    %v598 = vunpack.c.l.b16 %v412
    %v599 = vunpack.c.h.b16 %v412
    %v600 = vunpack.c.l.b16 %v413
    %v601 = vunpack.c.h.b16 %v413
    %v602 = vunpack.c.l.b16 %v414
    %v603 = vunpack.c.h.b16 %v414
    %v604 = vunpack.c.l.b16 %v415
    %v605 = vunpack.c.h.b16 %v415
    %v606 = vunpack.c.l.b16 %v416
    %v607 = vunpack.c.h.b16 %v416
    %v608 = vunpack.c.l.b16 %v417
    %v609 = vunpack.c.h.b16 %v417
    %v610 = vunpack.c.l.b16 %v418
    %v611 = vunpack.c.h.b16 %v418
    %v612 = vunpack.c.l.b16 %v419
    %v613 = vunpack.c.h.b16 %v419
    %v614 = vunpack.c.l.b16 %v420
    %v615 = vunpack.c.h.b16 %v420
    %v616 = vunpack.c.l.b16 %v421
    %v617 = vunpack.c.h.b16 %v421
    %v618 = vunpack.c.l.b16 %v422
    %v619 = vunpack.c.h.b16 %v422
    %v620 = vunpack.c.l.b16 %v423
    %v621 = vunpack.c.h.b16 %v423
    %v622 = vunpack.c.l.b16 %v424
    %v623 = vunpack.c.h.b16 %v424
    %v624 = vunpack.c.l.b16 %v425
    %v625 = vunpack.c.h.b16 %v425
    %v626 = vunpack.c.l.b16 %v426
    %v627 = vunpack.c.h.b16 %v426
    %v628 = vunpack.c.l.b16 %v427
    %v629 = vunpack.c.h.b16 %v427
    %v630 = vunpack.c.l.b16 %v428
    %v631 = vunpack.c.h.b16 %v428
    %v632 = vunpack.c.l.b16 %v429
    %v633 = vunpack.c.h.b16 %v429
    %v634 = vpack.c.b16 %v508, %v506
    %v635 = vpack.c.b16 %v509, %v507
    %v636 = vpack.c.b16 %v512, %v510
    %v637 = vpack.c.b16 %v513, %v511
    %v638 = vpack.c.b16 %v516, %v514
    %v639 = vpack.c.b16 %v517, %v515
    %v640 = vpack.c.b16 %v520, %v518
    %v641 = vpack.c.b16 %v521, %v519
    %v642 = vpack.c.b16 %v524, %v522
    %v643 = vpack.c.b16 %v525, %v523
    %v644 = vpack.c.b16 %v528, %v526
    %v645 = vpack.c.b16 %v529, %v527
    %v646 = vpack.c.b16 %v532, %v530
    %v647 = vpack.c.b16 %v533, %v531
    %v648 = vpack.c.b16 %v536, %v534
    %v649 = vpack.c.b16 %v537, %v535
    %v650 = vpack.c.b16 %v540, %v538
    %v651 = vpack.c.b16 %v541, %v539
    %v652 = vpack.c.b16 %v544, %v542
    %v653 = vpack.c.b16 %v545, %v543
    %v654 = vpack.c.b16 %v548, %v546
    %v655 = vpack.c.b16 %v549, %v547
    %v656 = vpack.c.b16 %v552, %v550
    %v657 = vpack.c.b16 %v553, %v551
    %v658 = vpack.c.b16 %v556, %v554
    %v659 = vpack.c.b16 %v557, %v555
    %v660 = vpack.c.b16 %v560, %v558
    %v661 = vpack.c.b16 %v561, %v559
    %v662 = vpack.c.b16 %v564, %v562
    %v663 = vpack.c.b16 %v565, %v563
    %v664 = vpack.c.b16 %v568, %v566
    %v665 = vpack.c.b16 %v569, %v567
    %v666 = vpack.c.b16 %v572, %v570
    %v667 = vpack.c.b16 %v573, %v571
    %v668 = vpack.c.b16 %v576, %v574
    %v669 = vpack.c.b16 %v577, %v575
    %v670 = vpack.c.b16 %v580, %v578
    %v671 = vpack.c.b16 %v581, %v579
    %v672 = vpack.c.b16 %v584, %v582
    %v673 = vpack.c.b16 %v585, %v583
    %v674 = vpack.c.b16 %v588, %v586
    %v675 = vpack.c.b16 %v589, %v587
    %v676 = vpack.c.b16 %v592, %v590
    %v677 = vpack.c.b16 %v593, %v591
    %v678 = vpack.c.b16 %v596, %v594
    %v679 = vpack.c.b16 %v597, %v595
    %v680 = vpack.c.b16 %v600, %v598
    %v681 = vpack.c.b16 %v601, %v599
    %v682 = vpack.c.b16 %v604, %v602
    %v683 = vpack.c.b16 %v605, %v603
    %v684 = vpack.c.b16 %v608, %v606
    %v685 = vpack.c.b16 %v609, %v607
    %v686 = vpack.c.b16 %v612, %v610
    %v687 = vpack.c.b16 %v613, %v611
    %v688 = vpack.c.b16 %v616, %v614
    %v689 = vpack.c.b16 %v617, %v615
    %v690 = vpack.c.b16 %v620, %v618
    %v691 = vpack.c.b16 %v621, %v619
    %v692 = vpack.c.b16 %v624, %v622
    %v693 = vpack.c.b16 %v625, %v623
    %v694 = vpack.c.b16 %v628, %v626
    %v695 = vpack.c.b16 %v629, %v627
    %v696 = vpack.c.b16 %v632, %v630
    %v697 = vpack.c.b16 %v633, %v631
    %762 = vmatprep.subr.bf16.mxu0 %v649
    %763 = vmatpush1.bf16.msra.mxu0 %v648
    %764 = vmatprep.subr.bf16.mxu0 %v647
    %765 = vmatpush1.bf16.msra.mxu0 %v646
    %766 = vmatprep.subr.bf16.mxu0 %v645
    %767 = vmatpush1.bf16.msra.mxu0 %v644
    %768 = vmatprep.subr.bf16.mxu0 %v643
    %769 = vmatpush1.bf16.msra.mxu0 %v642
    %770 = vmatprep.subr.bf16.mxu0 %v641
    %771 = vmatpush1.bf16.msra.mxu0 %v640
    %772 = vmatprep.subr.bf16.mxu0 %v639
    %773 = vmatpush1.bf16.msra.mxu0 %v638
    %774 = vmatprep.subr.bf16.mxu0 %v637
    %775 = vmatpush1.bf16.msra.mxu0 %v636
    %776 = vmatprep.subr.bf16.mxu0 %v635
    %777 = vmatpush1.bf16.msra.mxu0 %v634
    %778 = vmatprep.subr.bf16.mxu0 %v665
    %779 = vmatpush2.bf16.msra.mxu0 %v664
    %780 = vmatprep.subr.bf16.mxu0 %v663
    %781 = vmatpush2.bf16.msra.mxu0 %v662
    %782 = vmatprep.subr.bf16.mxu0 %v661
    %783 = vmatpush2.bf16.msra.mxu0 %v660
    %784 = vmatprep.subr.bf16.mxu0 %v659
    %785 = vmatpush2.bf16.msra.mxu0 %v658
    %786 = vmatprep.subr.bf16.mxu0 %v657
    %787 = vmatpush2.bf16.msra.mxu0 %v656
    %788 = vmatprep.subr.bf16.mxu0 %v655
    %789 = vmatpush2.bf16.msra.mxu0 %v654
    %790 = vmatprep.subr.bf16.mxu0 %v653
    %791 = vmatpush2.bf16.msra.mxu0 %v652
    %792 = vmatprep.subr.bf16.mxu0 %v651
    %793 = vmatpush2.bf16.msra.mxu0 %v650
    %794 = vmatprep.mubr.bf16.mxu0 %v359
    %795 = vmatmul.mubr.bf16.gmra.mxu0 %v358
    %v796 = vpop.f32.mrf.mxu0
    %v797 = vadd.f32 %v435, %v796
    %v798 = vpop.f32.mrf.mxu0
    %v799 = vadd.f32 %v439, %v798
    %v800 = vpop.f32.mrf.mxu0
    %v801 = vadd.f32 %v435, %v800
    %v802 = vpop.f32.mrf.mxu0
    %v803 = vadd.f32 %v439, %v802
    %804 = vmatprep.mubr.bf16.mxu0 %v363
    %805 = vmatmul.mubr.bf16.gmra.mxu0 %v362
    %v806 = vpop.f32.mrf.mxu0
    %v807 = vadd.f32 %v435, %v806
    %v808 = vpop.f32.mrf.mxu0
    %v809 = vadd.f32 %v439, %v808
    %v810 = vpop.f32.mrf.mxu0
    %v811 = vadd.f32 %v435, %v810
    %v812 = vpop.f32.mrf.mxu0
    %v813 = vadd.f32 %v439, %v812
    %814 = vdwg.mxu0
    %815 = vmatprep.subr.bf16.mxu0 %v681
    %816 = vmatpush1.bf16.msra.mxu0 %v680
    %817 = vmatprep.subr.bf16.mxu0 %v679
    %818 = vmatpush1.bf16.msra.mxu0 %v678
    %819 = vmatprep.subr.bf16.mxu0 %v677
    %820 = vmatpush1.bf16.msra.mxu0 %v676
    %821 = vmatprep.subr.bf16.mxu0 %v675
    %822 = vmatpush1.bf16.msra.mxu0 %v674
    %823 = vmatprep.subr.bf16.mxu0 %v673
    %824 = vmatpush1.bf16.msra.mxu0 %v672
    %825 = vmatprep.subr.bf16.mxu0 %v671
    %826 = vmatpush1.bf16.msra.mxu0 %v670
    %827 = vmatprep.subr.bf16.mxu0 %v669
    %828 = vmatpush1.bf16.msra.mxu0 %v668
    %829 = vmatprep.subr.bf16.mxu0 %v667
    %830 = vmatpush1.bf16.msra.mxu0 %v666
    %831 = vmatprep.subr.bf16.mxu0 %v697
    %832 = vmatpush2.bf16.msra.mxu0 %v696
    %833 = vmatprep.subr.bf16.mxu0 %v695
    %834 = vmatpush2.bf16.msra.mxu0 %v694
    %835 = vmatprep.subr.bf16.mxu0 %v693
    %836 = vmatpush2.bf16.msra.mxu0 %v692
    %837 = vmatprep.subr.bf16.mxu0 %v691
    %838 = vmatpush2.bf16.msra.mxu0 %v690
    %839 = vmatprep.subr.bf16.mxu0 %v689
    %840 = vmatpush2.bf16.msra.mxu0 %v688
    %841 = vmatprep.subr.bf16.mxu0 %v687
    %842 = vmatpush2.bf16.msra.mxu0 %v686
    %843 = vmatprep.subr.bf16.mxu0 %v685
    %844 = vmatpush2.bf16.msra.mxu0 %v684
    %845 = vmatprep.subr.bf16.mxu0 %v683
    %846 = vmatpush2.bf16.msra.mxu0 %v682
    %847 = vmatprep.mubr.bf16.mxu0 %v361
    %848 = vmatmul.mubr.bf16.gmra.mxu0 %v360
    %v849 = vpop.f32.mrf.mxu0
    %v850 = vadd.f32 %v797, %v849
    %v851 = vpop.f32.mrf.mxu0
    %v852 = vadd.f32 %v799, %v851
    %v853 = vpop.f32.mrf.mxu0
    %v854 = vadd.f32 %v801, %v853
    %v855 = vpop.f32.mrf.mxu0
    %v856 = vadd.f32 %v803, %v855
    %857 = vmatprep.mubr.bf16.mxu0 %v365
    %858 = vmatmul.mubr.bf16.gmra.mxu0 %v364
    %v859 = vpop.f32.mrf.mxu0
    %v860 = vadd.f32 %v807, %v859
    %v861 = vpop.f32.mrf.mxu0
    %v862 = vadd.f32 %v809, %v861
    %v863 = vpop.f32.mrf.mxu0
    %v864 = vadd.f32 %v811, %v863
    %v865 = vpop.f32.mrf.mxu0
    %v866 = vadd.f32 %v813, %v865
    %867 = vdwg.mxu0
    %vm868 = vcmp.gt.f32.partialorder %v850, 0.0
    %vm869 = vcmp.gt.f32.partialorder %v852, 0.0
    %vm870 = vcmp.gt.f32.partialorder %v854, 0.0
    %vm871 = vcmp.gt.f32.partialorder %v856, 0.0
    %vm872 = vcmp.gt.f32.partialorder %v860, 0.0
    %vm873 = vcmp.gt.f32.partialorder %v862, 0.0
    %vm874 = vcmp.gt.f32.partialorder %v864, 0.0
    %vm875 = vcmp.gt.f32.partialorder %v866, 0.0
    %v876 = vmul.f32 %v850, 1.442695
    %v877 = vpow.pop %v876
    %v878 = vmul.f32 %v852, 1.442695
    %v879 = vpow.pop %v878
    %v880 = vmul.f32 %v854, 1.442695
    %v881 = vpow.pop %v880
    %v882 = vmul.f32 %v856, 1.442695
    %v883 = vpow.pop %v882
    %v884 = vmul.f32 %v860, 1.442695
    %v885 = vpow.pop %v884
    %v886 = vmul.f32 %v862, 1.442695
    %v887 = vpow.pop %v886
    %v888 = vmul.f32 %v864, 1.442695
    %v889 = vpow.pop %v888
    %v890 = vmul.f32 %v866, 1.442695
    %v891 = vpow.pop %v890
    %v892 = vsub.f32 %v877, 1.0
    %v893 = vsub.f32 %v879, 1.0
    %v894 = vsub.f32 %v881, 1.0
    %v895 = vsub.f32 %v883, 1.0
    %v896 = vsub.f32 %v885, 1.0
    %v897 = vsub.f32 %v887, 1.0
    %v898 = vsub.f32 %v889, 1.0
    %v899 = vsub.f32 %v891, 1.0
    %v900 = vmul.f32 %v892, 1.6732632
    %v901 = vmul.f32 %v893, 1.6732632
    %v902 = vmul.f32 %v894, 1.6732632
    %v903 = vmul.f32 %v895, 1.6732632
    %v904 = vmul.f32 %v896, 1.6732632
    %v905 = vmul.f32 %v897, 1.6732632
    %v906 = vmul.f32 %v898, 1.6732632
    %v907 = vmul.f32 %v899, 1.6732632
    %v908 = vsel %vm868, %v850, %v900
    %v909 = vsel %vm869, %v852, %v901
    %v910 = vsel %vm870, %v854, %v902
    %v911 = vsel %vm871, %v856, %v903
    %v912 = vsel %vm872, %v860, %v904
    %v913 = vsel %vm873, %v862, %v905
    %v914 = vsel %vm874, %v864, %v906
    %v915 = vsel %vm875, %v866, %v907
    %v916 = vmul.f32 %v908, 1.050701
    %v917 = vmul.f32 %v909, 1.050701
    %v918 = vmul.f32 %v910, 1.050701
    %v919 = vmul.f32 %v911, 1.050701
    %v920 = vmul.f32 %v912, 1.050701
    %v921 = vmul.f32 %v913, 1.050701
    %v922 = vmul.f32 %v914, 1.050701
    %v923 = vmul.f32 %v915, 1.050701
    %v924 = vpack.c.bf16 %v918, %v916
    %v925 = vpack.c.bf16 %v919, %v917
    %v926 = vpack.c.bf16 %v922, %v920
    %v927 = vpack.c.bf16 %v923, %v921
    %v928 = vld [vmem:[%s7] sm:$0xf]
    %v929 = vld [vmem:[%s7 + $0x4] sm:$0xf]
    %v930 = vld [vmem:[%s7 + $0x8] sm:$0xf]
    %v931 = vld [vmem:[%s7 + $0xc] sm:$0xf]
    %v932 = vld [vmem:[%s7 + $0x10] sm:$0xf]
    %v933 = vld [vmem:[%s7 + $0x14] sm:$0xf]
    %v934 = vld [vmem:[%s7 + $0x18] sm:$0xf]
    %v935 = vld [vmem:[%s7 + $0x1c] sm:$0xf]
    %v936 = vld [vmem:[%s7 + $0x20] sm:$0xf]
    %v937 = vld [vmem:[%s7 + $0x24] sm:$0xf]
    %v938 = vld [vmem:[%s7 + $0x28] sm:$0xf]
    %v939 = vld [vmem:[%s7 + $0x2c] sm:$0xf]
    %v940 = vld [vmem:[%s7 + $0x30] sm:$0xf]
    %v941 = vld [vmem:[%s7 + $0x34] sm:$0xf]
    %v942 = vld [vmem:[%s7 + $0x38] sm:$0xf]
    %v943 = vld [vmem:[%s7 + $0x3c] sm:$0xf]
    %v944 = vld [vmem:[%s7 + $0x40] sm:$0xf]
    %v945 = vld [vmem:[%s7 + $0x44] sm:$0xf]
    %v946 = vld [vmem:[%s7 + $0x48] sm:$0xf]
    %v947 = vld [vmem:[%s7 + $0x4c] sm:$0xf]
    %v948 = vld [vmem:[%s7 + $0x50] sm:$0xf]
    %v949 = vld [vmem:[%s7 + $0x54] sm:$0xf]
    %v950 = vld [vmem:[%s7 + $0x58] sm:$0xf]
    %v951 = vld [vmem:[%s7 + $0x5c] sm:$0xf]
    %v952 = vld [vmem:[%s7 + $0x60] sm:$0xf]
    %v953 = vld [vmem:[%s7 + $0x64] sm:$0xf]
    %v954 = vld [vmem:[%s7 + $0x68] sm:$0xf]
    %v955 = vld [vmem:[%s7 + $0x6c] sm:$0xf]
    %v956 = vld [vmem:[%s7 + $0x70] sm:$0xf]
    %v957 = vld [vmem:[%s7 + $0x74] sm:$0xf]
    %v958 = vld [vmem:[%s7 + $0x78] sm:$0xf]
    %v959 = vld [vmem:[%s7 + $0x7c] sm:$0xf]
    %v960 = vld [vmem:[%s8] sm:$0x1]
    %v962 = vlaneseq
    %v963 = vshrl.u32 %v962, 7
    %v964 = vsub.s32 0, %v963
    %v965 = vrot.slane %v960, %v964
    %v999 = vunpack.c.l.b16 %v928
    %v1000 = vunpack.c.l.b16 %v929
    %v1001 = vunpack.c.l.b16 %v930
    %v1002 = vunpack.c.l.b16 %v931
    %v1003 = vunpack.c.l.b16 %v932
    %v1004 = vunpack.c.l.b16 %v933
    %v1005 = vunpack.c.l.b16 %v934
    %v1006 = vunpack.c.l.b16 %v935
    %v1007 = vunpack.c.l.b16 %v936
    %v1008 = vunpack.c.l.b16 %v937
    %v1009 = vunpack.c.l.b16 %v938
    %v1010 = vunpack.c.l.b16 %v939
    %v1011 = vunpack.c.l.b16 %v940
    %v1012 = vunpack.c.l.b16 %v941
    %v1013 = vunpack.c.l.b16 %v942
    %v1014 = vunpack.c.l.b16 %v943
    %v1015 = vunpack.c.l.b16 %v944
    %v1016 = vunpack.c.l.b16 %v945
    %v1017 = vunpack.c.l.b16 %v946
    %v1018 = vunpack.c.l.b16 %v947
    %v1019 = vunpack.c.l.b16 %v948
    %v1020 = vunpack.c.l.b16 %v949
    %v1021 = vunpack.c.l.b16 %v950
    %v1022 = vunpack.c.l.b16 %v951
    %v1023 = vunpack.c.l.b16 %v952
    %v1024 = vunpack.c.l.b16 %v953
    %v1025 = vunpack.c.l.b16 %v954
    %v1026 = vunpack.c.l.b16 %v955
    %v1027 = vunpack.c.l.b16 %v956
    %v1028 = vunpack.c.l.b16 %v957
    %v1029 = vunpack.c.l.b16 %v958
    %v1030 = vunpack.c.l.b16 %v959
    %v1031 = vpack.c.b16 %v1000, %v999
    %v1032 = vpack.c.b16 %v1002, %v1001
    %v1033 = vpack.c.b16 %v1004, %v1003
    %v1034 = vpack.c.b16 %v1006, %v1005
    %v1035 = vpack.c.b16 %v1008, %v1007
    %v1036 = vpack.c.b16 %v1010, %v1009
    %v1037 = vpack.c.b16 %v1012, %v1011
    %v1038 = vpack.c.b16 %v1014, %v1013
    %v1039 = vpack.c.b16 %v1016, %v1015
    %v1040 = vpack.c.b16 %v1018, %v1017
    %v1041 = vpack.c.b16 %v1020, %v1019
    %v1042 = vpack.c.b16 %v1022, %v1021
    %v1043 = vpack.c.b16 %v1024, %v1023
    %v1044 = vpack.c.b16 %v1026, %v1025
    %v1045 = vpack.c.b16 %v1028, %v1027
    %v1046 = vpack.c.b16 %v1030, %v1029
    %1063 = vmatprep.subr.bf16.mxu0 0
    %1064 = vmatpush1.bf16.msra.mxu0 %v1038
    %1065 = vmatprep.subr.bf16.mxu0 0
    %1066 = vmatpush1.bf16.msra.mxu0 %v1037
    %1067 = vmatprep.subr.bf16.mxu0 0
    %1068 = vmatpush1.bf16.msra.mxu0 %v1036
    %1069 = vmatprep.subr.bf16.mxu0 0
    %1070 = vmatpush1.bf16.msra.mxu0 %v1035
    %1071 = vmatprep.subr.bf16.mxu0 0
    %1072 = vmatpush1.bf16.msra.mxu0 %v1034
    %1073 = vmatprep.subr.bf16.mxu0 0
    %1074 = vmatpush1.bf16.msra.mxu0 %v1033
    %1075 = vmatprep.subr.bf16.mxu0 0
    %1076 = vmatpush1.bf16.msra.mxu0 %v1032
    %1077 = vmatprep.subr.bf16.mxu0 0
    %1078 = vmatpush1.bf16.msra.mxu0 %v1031
    %1079 = vmatprep.subr.bf16.mxu0 0
    %1080 = vmatpush2.bf16.msra.mxu0 %v1046
    %1081 = vmatprep.subr.bf16.mxu0 0
    %1082 = vmatpush2.bf16.msra.mxu0 %v1045
    %1083 = vmatprep.subr.bf16.mxu0 0
    %1084 = vmatpush2.bf16.msra.mxu0 %v1044
    %1085 = vmatprep.subr.bf16.mxu0 0
    %1086 = vmatpush2.bf16.msra.mxu0 %v1043
    %1087 = vmatprep.subr.bf16.mxu0 0
    %1088 = vmatpush2.bf16.msra.mxu0 %v1042
    %1089 = vmatprep.subr.bf16.mxu0 0
    %1090 = vmatpush2.bf16.msra.mxu0 %v1041
    %1091 = vmatprep.subr.bf16.mxu0 0
    %1092 = vmatpush2.bf16.msra.mxu0 %v1040
    %1093 = vmatprep.subr.bf16.mxu0 0
    %1094 = vmatpush2.bf16.msra.mxu0 %v1039
    %1095 = vmatprep.mubr.bf16.mxu0 %v925
    %1096 = vmatmul.mubr.bf16.gmra.mxu0 %v924
    %v1097 = vpop.f32.mrf.mxu0
    %v1098 = vadd.f32 %v965, %v1097
    %v1099 = vpop.f32.mrf.mxu0
    %v1100 = vpop.f32.mrf.mxu0
    %v1101 = vadd.f32 %v965, %v1100
    %v1102 = vpop.f32.mrf.mxu0
    %1103 = vmatprep.mubr.bf16.mxu0 %v927
    %1104 = vmatmul.mubr.bf16.gmra.mxu0 %v926
    %v1105 = vpop.f32.mrf.mxu0
    %v1106 = vadd.f32 %v965, %v1105
    %v1107 = vpop.f32.mrf.mxu0
    %v1108 = vpop.f32.mrf.mxu0
    %v1109 = vadd.f32 %v965, %v1108
    %v1110 = vpop.f32.mrf.mxu0
    %1111 = vdwg.mxu0
    %vm1112 = vcmp.gt.f32.partialorder %v1098, 0.0
    %vm1113 = vcmp.gt.f32.partialorder %v1101, 0.0
    %vm1114 = vcmp.gt.f32.partialorder %v1106, 0.0
    %vm1115 = vcmp.gt.f32.partialorder %v1109, 0.0
    %v1116 = vmul.f32 %v1098, 1.442695
    %v1117 = vpow.pop %v1116
    %v1118 = vmul.f32 %v1101, 1.442695
    %v1119 = vpow.pop %v1118
    %v1120 = vmul.f32 %v1106, 1.442695
    %v1121 = vpow.pop %v1120
    %v1122 = vmul.f32 %v1109, 1.442695
    %v1123 = vpow.pop %v1122
    %v1124 = vsub.f32 %v1117, 1.0
    %v1125 = vsub.f32 %v1119, 1.0
    %v1126 = vsub.f32 %v1121, 1.0
    %v1127 = vsub.f32 %v1123, 1.0
    %v1128 = vmul.f32 %v1124, 1.6732632
    %v1129 = vmul.f32 %v1125, 1.6732632
    %v1130 = vmul.f32 %v1126, 1.6732632
    %v1131 = vmul.f32 %v1127, 1.6732632
    %v1132 = vsel %vm1112, %v1098, %v1128
    %v1133 = vsel %vm1113, %v1101, %v1129
    %v1134 = vsel %vm1114, %v1106, %v1130
    %v1135 = vsel %vm1115, %v1109, %v1131
    %v1136 = vmul.f32 %v1132, 1.050701
    %v1137 = vmul.f32 %v1133, 1.050701
    %v1138 = vmul.f32 %v1134, 1.050701
    %v1139 = vmul.f32 %v1135, 1.050701
    %v1140 = vpack.c.bf16 %v1137, %v1136
    %v1141 = vpack.c.bf16 %v1139, %v1138
    %v1142 = vld [vmem:[%s9] sm:$0xf]
    %v1143 = vld [vmem:[%s9 + $0x4] sm:$0xf]
    %v1144 = vld [vmem:[%s9 + $0x8] sm:$0xf]
    %v1145 = vld [vmem:[%s9 + $0xc] sm:$0xf]
    %v1146 = vld [vmem:[%s9 + $0x10] sm:$0xf]
    %v1147 = vld [vmem:[%s9 + $0x14] sm:$0xf]
    %v1148 = vld [vmem:[%s9 + $0x18] sm:$0xf]
    %v1149 = vld [vmem:[%s9 + $0x1c] sm:$0xf]
    %v1150 = vld [vmem:[%s9 + $0x20] sm:$0xf]
    %v1151 = vld [vmem:[%s9 + $0x24] sm:$0xf]
    %v1152 = vld [vmem:[%s9 + $0x28] sm:$0xf]
    %v1153 = vld [vmem:[%s9 + $0x2c] sm:$0xf]
    %v1154 = vld [vmem:[%s9 + $0x30] sm:$0xf]
    %v1155 = vld [vmem:[%s9 + $0x34] sm:$0xf]
    %v1156 = vld [vmem:[%s9 + $0x38] sm:$0xf]
    %v1157 = vld [vmem:[%s9 + $0x3c] sm:$0xf]
    %v1158 = vld [vmem:[%s10] sm:$0x1]
    %v1160 = vlaneseq
    %v1161 = vshrl.u32 %v1160, 7
    %v1162 = vsub.s32 0, %v1161
    %v1163 = vrot.slane %v1158, %v1162
    %v1181 = vunpack.c.l.b16 %v1142
    %v1182 = vunpack.c.l.b16 %v1143
    %v1183 = vunpack.c.l.b16 %v1144
    %v1184 = vunpack.c.l.b16 %v1145
    %v1185 = vunpack.c.l.b16 %v1146
    %v1186 = vunpack.c.l.b16 %v1147
    %v1187 = vunpack.c.l.b16 %v1148
    %v1188 = vunpack.c.l.b16 %v1149
    %v1189 = vunpack.c.l.b16 %v1150
    %v1190 = vunpack.c.l.b16 %v1151
    %v1191 = vunpack.c.l.b16 %v1152
    %v1192 = vunpack.c.l.b16 %v1153
    %v1193 = vunpack.c.l.b16 %v1154
    %v1194 = vunpack.c.l.b16 %v1155
    %v1195 = vunpack.c.l.b16 %v1156
    %v1196 = vunpack.c.l.b16 %v1157
    %v1197 = vpack.c.b16 %v1182, %v1181
    %v1198 = vpack.c.b16 %v1184, %v1183
    %v1199 = vpack.c.b16 %v1186, %v1185
    %v1200 = vpack.c.b16 %v1188, %v1187
    %v1201 = vpack.c.b16 %v1190, %v1189
    %v1202 = vpack.c.b16 %v1192, %v1191
    %v1203 = vpack.c.b16 %v1194, %v1193
    %v1204 = vpack.c.b16 %v1196, %v1195
    %1213 = vmatprep.subr.bf16.mxu0 0
    %1214 = vmatpush1.bf16.msra.mxu0 %v1204
    %1215 = vmatprep.subr.bf16.mxu0 0
    %1216 = vmatpush1.bf16.msra.mxu0 %v1203
    %1217 = vmatprep.subr.bf16.mxu0 0
    %1218 = vmatpush1.bf16.msra.mxu0 %v1202
    %1219 = vmatprep.subr.bf16.mxu0 0
    %1220 = vmatpush1.bf16.msra.mxu0 %v1201
    %1221 = vmatprep.subr.bf16.mxu0 0
    %1222 = vmatpush1.bf16.msra.mxu0 %v1200
    %1223 = vmatprep.subr.bf16.mxu0 0
    %1224 = vmatpush1.bf16.msra.mxu0 %v1199
    %1225 = vmatprep.subr.bf16.mxu0 0
    %1226 = vmatpush1.bf16.msra.mxu0 %v1198
    %1227 = vmatprep.subr.bf16.mxu0 0
    %1228 = vmatpush1.bf16.msra.mxu0 %v1197
    %1229 = vmatprep.subr.bf16.mxu0 0
    %1230 = vmatpush2.bf16.msra.mxu0 0
    %1231 = vmatprep.subr.bf16.mxu0 0
    %1232 = vmatpush2.bf16.msra.mxu0 0
    %1233 = vmatprep.subr.bf16.mxu0 0
    %1234 = vmatpush2.bf16.msra.mxu0 0
    %1235 = vmatprep.subr.bf16.mxu0 0
    %1236 = vmatpush2.bf16.msra.mxu0 0
    %1237 = vmatprep.subr.bf16.mxu0 0
    %1238 = vmatpush2.bf16.msra.mxu0 0
    %1239 = vmatprep.subr.bf16.mxu0 0
    %1240 = vmatpush2.bf16.msra.mxu0 0
    %1241 = vmatprep.subr.bf16.mxu0 0
    %1242 = vmatpush2.bf16.msra.mxu0 0
    %1243 = vmatprep.subr.bf16.mxu0 0
    %1244 = vmatpush2.bf16.msra.mxu0 0
    %1245 = vmatprep.mubr.bf16.mxu0 0
    %1246 = vmatmul.mubr.bf16.gmra.mxu0 %v1140
    %v1247 = vpop.f32.mrf.mxu0
    %v1248 = vadd.f32 %v1163, %v1247
    %v1249 = vpop.f32.mrf.mxu0
    %v1250 = vpop.f32.mrf.mxu0
    %v1251 = vadd.f32 %v1163, %v1250
    %v1252 = vpop.f32.mrf.mxu0
    %1253 = vmatprep.mubr.bf16.mxu0 0
    %1254 = vmatmul.mubr.bf16.gmra.mxu0 %v1141
    %v1255 = vpop.f32.mrf.mxu0
    %v1256 = vadd.f32 %v1163, %v1255
    %v1257 = vpop.f32.mrf.mxu0
    %v1258 = vpop.f32.mrf.mxu0
    %v1259 = vadd.f32 %v1163, %v1258
    %v1260 = vpop.f32.mrf.mxu0
    %1261 = vdwg.mxu0
    %v1262 = vld [vmem:[#allocation2] sm:$0x1]
    %v1263 = vld [vmem:[%s1] sm:$0xff]
    %v1264 = vld [vmem:[%s1 + $0x8] sm:$0xff]
    %v1265 = vld [vmem:[%s1 + $0x10] sm:$0xff]
    %v1266 = vld [vmem:[%s1 + $0x18] sm:$0xff]
    %v1268 = vlaneseq
    %v1269 = vshrl.u32 %v1268, 7
    %v1270 = vsub.s32 0, %v1269
    %v1271 = vrot.slane %v1262, %v1270
    %v1273 = vmul.f32 %v1271, %v1263
    %v1274 = vmul.f32 %v1271, %v1264
    %v1275 = vmul.f32 %v1271, %v1265
    %v1276 = vmul.f32 %v1271, %v1266
    %v1277 = vadd.f32 %v1248, %v1273
    %v1278 = vadd.f32 %v1251, %v1274
    %v1279 = vadd.f32 %v1256, %v1275
    %v1280 = vadd.f32 %v1259, %v1276
    %v1281 = vmul.f32 %v1263, %v1263
    %v1282 = vmul.f32 %v1264, %v1264
    %v1283 = vmul.f32 %v1265, %v1265
    %v1284 = vmul.f32 %v1266, %v1266
    %v1285 = vadd.f32 %v1281, 0.0
    %v1286 = vadd.f32 %v1282, 0.0
    %v1287 = vadd.f32 %v1283, 0.0
    %v1288 = vadd.f32 %v1284, 0.0
    %v1289 = vmul.f32 %v1285, -0.5
    %v1290 = vmul.f32 %v1286, -0.5
    %v1291 = vmul.f32 %v1287, -0.5
    %v1292 = vmul.f32 %v1288, -0.5
    %v1293 = vlog2.pop %v1262
    %v1294 = vmul.f32 %v1293, 0.6931472
    %v1295 = vadd.f32 %v1294, 0.0
    %v1297 = vlaneseq
    %v1298 = vshrl.u32 %v1297, 7
    %v1299 = vsub.s32 0, %v1298
    %v1300 = vrot.slane %v1295, %v1299
    %v1302 = vsub.f32 %v1289, %v1300
    %v1303 = vsub.f32 %v1290, %v1300
    %v1304 = vsub.f32 %v1291, %v1300
    %v1305 = vsub.f32 %v1292, %v1300
    %v1306 = vsub.f32 %v1302, 0.9189385
    %v1307 = vsub.f32 %v1303, 0.9189385
    %v1308 = vsub.f32 %v1304, 0.9189385
    %v1309 = vsub.f32 %v1305, 0.9189385
    %vm1310 = vcmask 15360
    %1311 = vst.msk [vmem:[%s11] sm:$0xff] %vm1310, %v1248
    %1312 = vst.msk [vmem:[%s11 + $0x8] sm:$0xff] %vm1310, %v1251
    %1313 = vst.msk [vmem:[%s11 + $0x10] sm:$0xff] %vm1310, %v1256
    %1314 = vst.msk [vmem:[%s11 + $0x18] sm:$0xff] %vm1310, %v1259
    %1319 = vrot.lane.b32.xlu0 %v1277, 2
    %v1320 = vpop.permute.xlu0 %1319
    %1321 = vrot.lane.b32.xlu0 %v1278, 2
    %v1322 = vpop.permute.xlu0 %1321
    %1323 = vrot.lane.b32.xlu0 %v1279, 2
    %v1324 = vpop.permute.xlu0 %1323
    %1325 = vrot.lane.b32.xlu0 %v1280, 2
    %v1326 = vpop.permute.xlu0 %1325
    %vm1331 = vcmask 23568
    %1332 = vst.msk [vmem:[%s11] sm:$0xff] %vm1331, %v1320
    %1333 = vst.msk [vmem:[%s11 + $0x8] sm:$0xff] %vm1331, %v1322
    %1334 = vst.msk [vmem:[%s11 + $0x10] sm:$0xff] %vm1331, %v1324
    %1335 = vst.msk [vmem:[%s11 + $0x18] sm:$0xff] %vm1331, %v1326
    %1340 = vrot.lane.b32.xlu0 %v1306, 3
    %v1341 = vpop.permute.xlu0 %1340
    %1342 = vrot.lane.b32.xlu0 %v1307, 3
    %v1343 = vpop.permute.xlu0 %1342
    %1344 = vrot.lane.b32.xlu0 %v1308, 3
    %v1345 = vpop.permute.xlu0 %1344
    %1346 = vrot.lane.b32.xlu0 %v1309, 3
    %v1347 = vpop.permute.xlu0 %1346
    %vm1352 = vcmask 31768
    %1353 = vst.msk [vmem:[%s11] sm:$0xff] %vm1352, %v1341
    %1354 = vst.msk [vmem:[%s11 + $0x8] sm:$0xff] %vm1352, %v1343
    %1355 = vst.msk [vmem:[%s11 + $0x10] sm:$0xff] %vm1352, %v1345
    %1356 = vst.msk [vmem:[%s11 + $0x18] sm:$0xff] %vm1352, %v1347
    // Predicated region
    $region54: #{tpu_custom_call.1} parent=1 // pred_check
      _
    $region55: #{tpu_custom_call.1} parent=1 // pred_check_branch
      %1358 = sbr.rel (0) target = $region57
    $region56: #{tpu_custom_call.1} parent=1 // pred_region
      _
    $region57: #{tpu_custom_call.1} parent=1 // pred_fallthru
      _
    // Predicated region
    $region58: #{tpu_custom_call.1} parent=1 // pred_check
      _
    $region59: #{tpu_custom_call.1} parent=1 // pred_check_branch
      %1360 = sbr.rel (0) target = $region61
    $region60: #{tpu_custom_call.1} parent=1 // pred_region
      _
    $region61: #{tpu_custom_call.1} parent=1 // pred_fallthru
      _
    %1361 = vsyncpa [#allocation4], 1
    %1362 = vsyncpa [#allocation6], 1

</llo_original>
